<compile_context>
chip_gen: v7x
topology: tpu7x:2x2x1
jax: 0.10.0
libtpu: 0.0.40
codegen_flags: <defaults>
</compile_context>

<pallas_src>
import math

import jax
import jax.numpy as jnp
from jax.experimental import pallas as pl
from jax.experimental.pallas import tpu as pltpu

MAX_LENGTH = 16     # mirrors Network.Max_length (=1000), scaled down for the demo
EMBED_DIM = 32      # hid_embed_dim
NUM_HEADS = 2       # attention_number
FINGER_DIM = 64     # protein_finger_dim
AA_DIM = 21         # amino-acid one-hot width
AA_PAD = 128        # lane-dense padded feature width for the pemb input
BATCH = 2
LN_EPS = 1e-12
BN_EPS = 1e-5

# Row indices of the packed (N_SLAB_ROWS, SLAB_W) parameter slab.
(R_BP, R_BQKV, R_BO, R_LNG, R_LNB,
 R_BSEQ, R_BN1S, R_BN1T, R_BSEQ1,
 R_BFIN, R_BN2S, R_BN2T, R_BFIN1,
 R_BTOT, R_BN3S, R_BN3T, R_BTOT1) = range(17)
N_SLAB_ROWS = 17
SLAB_W = 256        # widest packed vector is the stacked QKV bias (3*H*E = 192)


# -----------------------------------------------------------------------------
# Fused kernel: one grid step == one sample (batch axis marked "parallel")
# -----------------------------------------------------------------------------
def fused_forward_kernel(x_ref, fing_ref, slab_ref,
                         wp_ref, wqkv_ref, wo_ref, wseq_ref,
                         wseq1_ref, wfin_ref, wfin1_ref, wtot_ref, wtot1_ref,
                         out_ref):
    L = x_ref.shape[1]
    E = wp_ref.shape[1]
    H = wqkv_ref.shape[1] // (3 * E)
    inv_sqrt_e = 1.0 / math.sqrt(E)     # attention_head_size == E in this module
    bf16 = jnp.bfloat16

    def vec(row, width):                # static (1, width) slice of the bias slab
        return slab_ref[row:row + 1, :width]

    # ---- pemb: Linear(21 -> E), zero-padded K, kept f32 ----------------------
    x = x_ref[0]                                              # (L, AA_PAD)
    p_emb = jnp.dot(x, wp_ref[...],
                    preferred_element_type=jnp.float32) + vec(R_BP, E)

    # ---- self-attention: one stacked QKV push, per-head 32-lane slices -------
    qkv = jnp.dot(p_emb.astype(bf16), wqkv_ref[...],
                  preferred_element_type=jnp.float32) + vec(R_BQKV, 3 * H * E)
    ctx_heads = []
    for h in range(H):                  # static unroll, H is small
        q = qkv[:, h * E:(h + 1) * E].astype(bf16)
        k = qkv[:, (H + h) * E:(H + h + 1) * E].astype(bf16)
        v = qkv[:, (2 * H + h) * E:(2 * H + h + 1) * E].astype(bf16)
        # scores = q @ k.T : contraction over the last dim of both operands.
        s = jax.lax.dot_general(q, k, (((1,), (1,)), ((), ())),
                                preferred_element_type=jnp.float32) * inv_sqrt_e
        s = s - jnp.max(s, axis=-1, keepdims=True)            # per-sample softmax
        p = jnp.exp(s)
        # divide -> EUP approximate reciprocal + multiply (off the VALU path);
        # ~1e-3 relative error on the probabilities, fine for inference.
        probs = p * pl.reciprocal(jnp.sum(p, axis=-1, keepdims=True), approx=True)
        # dropout on probs is identity in eval mode
        ctx_heads.append(jnp.dot(probs.astype(bf16), v,
                                 preferred_element_type=jnp.float32))
    ctx = jnp.concatenate(ctx_heads, axis=-1)                  # (L, H*E)
    dense = jnp.dot(ctx.astype(bf16), wo_ref[...],
                    preferred_element_type=jnp.float32) + vec(R_BO, E)

    # ---- residual + LayerNorm (spec: biased variance, eps inside sqrt), f32 --
    hst = dense + p_emb
    mu = jnp.mean(hst, axis=-1, keepdims=True)
    var = jnp.mean((hst - mu) ** 2, axis=-1, keepdims=True)
    att = vec(R_LNG, E) * ((hst - mu) * jax.lax.rsqrt(var + LN_EPS)) + vec(R_LNB, E)

    # ---- seq branch: view(L*E) @ W_seq as ONE wide matmul --------------------
    # Row-major flatten (L, E) -> (1, L*E), expressed with static row slices +
    # one lane concat (equivalent to att.reshape(1, L*E), but only uses
    # slice/concat ops that Mosaic lowers unconditionally).
    att_flat = jnp.concatenate([att[l:l + 1, :] for l in range(L)], axis=-1)
    f = jnp.dot(att_flat.astype(bf16), wseq_ref[...],
                preferred_element_type=jnp.float32) + vec(R_BSEQ, E)
    # eval-mode BatchNorm folded to scale/shift in pack_params
    f = jnp.maximum(f * vec(R_BN1S, E) + vec(R_BN1T, E), 0.0)
    f = jnp.dot(f, wseq1_ref[...],
                preferred_element_type=jnp.float32) + vec(R_BSEQ1, E)

    # ---- fingerprint branch --------------------------------------------------
    g = jnp.dot(fing_ref[0], wfin_ref[...],
                preferred_element_type=jnp.float32) + vec(R_BFIN, E)
    g = jnp.maximum(g * vec(R_BN2S, E) + vec(R_BN2T, E), 0.0)
    g = jnp.dot(g, wfin1_ref[...],
                preferred_element_type=jnp.float32) + vec(R_BFIN1, E)

    # ---- head: concat -> Linear -> BN -> ReLU -> Linear ----------------------
    t = jnp.dot(jnp.concatenate([f, g], axis=-1), wtot_ref[...],
                preferred_element_type=jnp.float32) + vec(R_BTOT, E)
    t = jnp.maximum(t * vec(R_BN3S, E) + vec(R_BN3T, E), 0.0)
    out_ref[0] = jnp.dot(t, wtot1_ref[...],
                         preferred_element_type=jnp.float32) + vec(R_BTOT1, 2)


# -----------------------------------------------------------------------------
# One-time parameter re-layout (cheap host/XLA ops)
# -----------------------------------------------------------------------------
def pack_params(p):
    E, H = EMBED_DIM, NUM_HEADS
    bf16 = jnp.bfloat16

    def row(v, width):
        v = jnp.asarray(v, jnp.float32).reshape(1, -1)
        assert v.shape[1] == width, (v.shape, width)
        return jnp.pad(v, ((0, 0), (0, SLAB_W - width)))

    def bn_fold(bn):                         # eval-mode BN -> scale/shift
        gamma, beta, mean, var = bn
        scale = gamma / jnp.sqrt(var + BN_EPS)
        return scale, beta - mean * scale

    bn1s, bn1t = bn_fold(p['bn1'])
    bn2s, bn2t = bn_fold(p['bn2'])
    bn3s, bn3t = bn_fold(p['bn3'])
    bqkv = jnp.concatenate([p['bq'], p['bk'], p['bv']], axis=1)   # (1, 3*H*E)

    rows = [None] * N_SLAB_ROWS
    rows[R_BP] = row(p['bp'], E)
    rows[R_BQKV] = row(bqkv, 3 * H * E)
    rows[R_BO] = row(p['bo'], E)
    rows[R_LNG] = row(p['ln_g'], E)
    rows[R_LNB] = row(p['ln_b'], E)
    rows[R_BSEQ] = row(p['b_seq'], E)
    rows[R_BN1S] = row(bn1s, E)
    rows[R_BN1T] = row(bn1t, E)
    rows[R_BSEQ1] = row(p['b_seq1'], E)
    rows[R_BFIN] = row(p['b_fin'], E)
    rows[R_BN2S] = row(bn2s, E)
    rows[R_BN2T] = row(bn2t, E)
    rows[R_BFIN1] = row(p['b_fin1'], E)
    rows[R_BTOT] = row(p['b_tot'], E)
    rows[R_BN3S] = row(bn3s, E)
    rows[R_BN3T] = row(bn3t, E)
    rows[R_BTOT1] = row(p['b_tot1'], 2)
    slab = jnp.concatenate(rows, axis=0)                          # (17, 256)

    return {
        'slab': slab,
        # pemb weight, zero-padded 21 -> 128 input features (lane-dense K)
        'wp': jnp.pad(p['wp'], ((0, AA_PAD - AA_DIM), (0, 0))),
        # stacked QKV weight: one (E, 3*H*E) MXU push instead of 3*H small ones
        'wqkv': jnp.concatenate([p['wq'], p['wk'], p['wv']], axis=1).astype(bf16),
        'wo': p['wo'].astype(bf16),            # (H*E, E)
        'w_seq': p['w_seq'].astype(bf16),      # (L*E, E) -- the wide contraction
        'w_seq1': p['w_seq1'],
        'w_fin': p['w_fin'],
        'w_fin1': p['w_fin1'],
        'w_tot': p['w_tot'],
        'w_tot1': p['w_tot1'],
    }


# -----------------------------------------------------------------------------
# Wrapper: one fused pallas_call on a "parallel" batch grid
# -----------------------------------------------------------------------------
@jax.jit
def protein_crystallization_forward(protein_sequence, fingerprint, pp):
    B, L, A = protein_sequence.shape
    E, H = EMBED_DIM, NUM_HEADS

    x = jnp.pad(protein_sequence.astype(jnp.float32),
                ((0, 0), (0, 0), (0, AA_PAD - A)))               # (B, L, 128)
    fing = fingerprint.astype(jnp.float32).reshape(B, 1, -1)     # (B, 1, F)
    F = fing.shape[-1]

    weights = (pp['wp'], pp['wqkv'], pp['wo'], pp['w_seq'],
               pp['w_seq1'], pp['w_fin'], pp['w_fin1'], pp['w_tot'], pp['w_tot1'])

    def whole(arr):                     # full-array block, constant index map
        return pl.BlockSpec(arr.shape, lambda b: (0,) * arr.ndim)

    in_specs = ([pl.BlockSpec((1, L, AA_PAD), lambda b: (b, 0, 0)),
                 pl.BlockSpec((1, 1, F), lambda b: (b, 0, 0)),
                 whole(pp['slab'])]
                + [whole(w) for w in weights])

    # advisory cost estimate (matmul flops, exp/rsqrt counts, HBM bytes)
    flops = B * (2 * L * AA_PAD * E               # pemb
                 + 2 * L * E * 3 * H * E          # stacked QKV
                 + H * 2 * 2 * L * L * E          # scores + context per head
                 + 2 * L * H * E * E              # output projection
                 + 2 * L * E * E                  # seq-branch wide matmul
                 + 2 * (E * E + FINGER_DIM * E + E * E + 2 * E * E + E * 2))
    transcendentals = B * (H * L * L + 4 * L)
    bytes_accessed = (int(x.size) * 4 + int(fing.size) * 4
                      + int(pp['slab'].size) * 4 + B * 2 * 4
                      + sum(int(w.size) * w.dtype.itemsize for w in weights))

    out = pl.pallas_call(
        fused_forward_kernel,
        out_shape=jax.ShapeDtypeStruct((B, 1, 2), jnp.float32),
        grid=(B,),
        in_specs=in_specs,
        out_specs=pl.BlockSpec((1, 1, 2), lambda b: (b, 0, 0)),
        compiler_params=pltpu.CompilerParams(
            dimension_semantics=("parallel",)),   # one sample per core on v7x
        cost_estimate=pl.CostEstimate(flops=int(flops),
                                      transcendentals=int(transcendentals),
                                      bytes_accessed=int(bytes_accessed)),
    )(x, fing, pp['slab'], *weights)
    return out.reshape(B, 2)


# -----------------------------------------------------------------------------
# Deterministic parameter init (synthetic; shapes from the module __init__)
# -----------------------------------------------------------------------------
def init_params(key):
    E, H, L, F = EMBED_DIM, NUM_HEADS, MAX_LENGTH, FINGER_DIM

    def nxt():
        nonlocal key
        key, sub = jax.random.split(key)
        return sub

    def lin(din, dout):
        s = 1.0 / math.sqrt(din)
        w = jax.random.uniform(nxt(), (din, dout), jnp.float32, -s, s)
        b = jax.random.uniform(nxt(), (1, dout), jnp.float32, -s, s)
        return w, b

    def bn(dim):
        g = 1.0 + 0.1 * jax.random.normal(nxt(), (1, dim), jnp.float32)
        b = 0.1 * jax.random.normal(nxt(), (1, dim), jnp.float32)
        m = 0.1 * jax.random.normal(nxt(), (1, dim), jnp.float32)
        v = jax.random.uniform(nxt(), (1, dim), jnp.float32, 0.5, 1.5)
        return g, b, m, v

    p = {}
    p['wp'], p['bp'] = lin(AA_DIM, E)                 # pemb
    p['wq'], p['bq'] = lin(E, H * E)                  # SelfAttention.query
    p['wk'], p['bk'] = lin(E, H * E)                  # SelfAttention.key
    p['wv'], p['bv'] = lin(E, H * E)                  # SelfAttention.value
    p['wo'], p['bo'] = lin(H * E, E)                  # SelfOutput.dense
    p['ln_g'] = jnp.ones((1, E), jnp.float32)         # LayerNorm gamma
    p['ln_b'] = jnp.zeros((1, E), jnp.float32)        # LayerNorm beta
    p['w_seq'], p['b_seq'] = lin(E * L, E)            # protein_sequence_layer
    p['bn1'] = bn(E)                                  # protein_sequence_bn
    p['w_seq1'], p['b_seq1'] = lin(E, E)              # protein_sequence_layer_1
    p['w_fin'], p['b_fin'] = lin(F, E)                # protein_finger_layer
    p['bn2'] = bn(E)                                  # protein_finger_bn
    p['w_fin1'], p['b_fin1'] = lin(E, E)              # protein_finger_layer_1
    p['w_tot'], p['b_tot'] = lin(2 * E, E)            # total_layer
    p['bn3'] = bn(E)                                  # total_bn
    p['w_tot1'], p['b_tot1'] = lin(E, 2)              # total_layer_1
    return p


# -----------------------------------------------------------------------------
# Pure-JAX f32 reference (for checking the fused kernel)
# -----------------------------------------------------------------------------
def reference_forward(protein_sequence, fingerprint, p):
    E, H = EMBED_DIM, NUM_HEADS
    x = protein_sequence.astype(jnp.float32)
    B, L, _ = x.shape
    p_emb = x @ p['wp'] + p['bp']
    q = p_emb @ p['wq'] + p['bq']
    k = p_emb @ p['wk'] + p['bk']
    v = p_emb @ p['wv'] + p['bv']

    def split(t):
        return t.reshape(B, L, H, E).transpose(0, 2, 1, 3)

    qh, kh, vh = split(q), split(k), split(v)
    s = jnp.einsum('bhle,bhke->bhlk', qh, kh) / math.sqrt(E)
    probs = jax.nn.softmax(s, axis=-1)
    ctx = jnp.einsum('bhlk,bhke->bhle', probs, vh).transpose(0, 2, 1, 3).reshape(B, L, H * E)
    dense = ctx @ p['wo'] + p['bo']
    h = dense + p_emb
    mu = h.mean(-1, keepdims=True)
    var = ((h - mu) ** 2).mean(-1, keepdims=True)
    att = p['ln_g'] * ((h - mu) / jnp.sqrt(var + LN_EPS)) + p['ln_b']

    feat = att.reshape(B, L * E)

    def bn_eval(x_, bnp):
        g_, b_, m_, v_ = bnp
        return (x_ - m_) / jnp.sqrt(v_ + BN_EPS) * g_ + b_

    f = jax.nn.relu(bn_eval(feat @ p['w_seq'] + p['b_seq'], p['bn1']))
    f = f @ p['w_seq1'] + p['b_seq1']
    g = jax.nn.relu(bn_eval(fingerprint @ p['w_fin'] + p['b_fin'], p['bn2']))
    g = g @ p['w_fin1'] + p['b_fin1']
    cat = jnp.concatenate([f, g], axis=1)
    t = jax.nn.relu(bn_eval(cat @ p['w_tot'] + p['b_tot'], p['bn3']))
    return t @ p['w_tot1'] + p['b_tot1']


if __name__ == "__main__":
    key = jax.random.PRNGKey(0)
    k_params, k_seq, k_fing = jax.random.split(key, 3)
    params = init_params(k_params)
    packed = pack_params(params)   # one-time parameter re-layout

    aa_idx = jax.random.randint(k_seq, (BATCH, MAX_LENGTH), 0, AA_DIM)
    protein_sequence = jax.nn.one_hot(aa_idx, AA_DIM, dtype=jnp.float32)  # (B, L, 21)
    fingerprint = jax.random.normal(k_fing, (BATCH, FINGER_DIM), jnp.float32)

    out = protein_crystallization_forward(protein_sequence, fingerprint, packed)
    out = jax.block_until_ready(out)

    ref = reference_forward(protein_sequence, fingerprint, params)
    assert out.shape == (BATCH, 2), out.shape
    # bf16 MXU operands (attention + seq contraction) and the approximate EUP
    # reciprocal in the softmax vs. an all-f32 reference: expected |delta| is
    # ~1e-2 at these shapes; 3e-2 keeps margin while still catching real bugs.
    assert jnp.allclose(out, ref, atol=3e-2, rtol=3e-2), (out, ref)

    print("KERNEL_OK")
</pallas_src>

<mosaic_0001>
module attributes {stable_mosaic.version = 11 : i64} {
  func.func @fused_forward_kernel(%arg0: i32, %arg1: memref<1x16x128xf32, #tpu.memory_space<vmem>>, %arg2: memref<1x1x64xf32, #tpu.memory_space<vmem>>, %arg3: memref<17x256xf32, #tpu.memory_space<vmem>>, %arg4: memref<128x32xf32, #tpu.memory_space<vmem>>, %arg5: memref<32x192xbf16, #tpu.memory_space<vmem>>, %arg6: memref<64x32xbf16, #tpu.memory_space<vmem>>, %arg7: memref<512x32xbf16, #tpu.memory_space<vmem>>, %arg8: memref<32x32xf32, #tpu.memory_space<vmem>>, %arg9: memref<64x32xf32, #tpu.memory_space<vmem>>, %arg10: memref<32x32xf32, #tpu.memory_space<vmem>>, %arg11: memref<64x32xf32, #tpu.memory_space<vmem>>, %arg12: memref<32x2xf32, #tpu.memory_space<vmem>>, %arg13: memref<1x1x2xf32, #tpu.memory_space<vmem>>) attributes {dimension_semantics = [#tpu.dimension_semantics<parallel>], iteration_bounds = array<i64: 2>, scalar_prefetch = 0 : i64, scratch_operands = 0 : i64, tpu.core_type = #tpu.core_type<tc>, window_params = [{transform_indices = @transform_0, window_bounds = array<i64: 1, 16, 128>}, {transform_indices = @transform_1, window_bounds = array<i64: 1, 1, 64>}, {pipeline_mode = #tpu.pipeline_mode<synchronous>, transform_indices = @transform_2, window_bounds = array<i64: 17, 256>}, {pipeline_mode = #tpu.pipeline_mode<synchronous>, transform_indices = @transform_3, window_bounds = array<i64: 128, 32>}, {pipeline_mode = #tpu.pipeline_mode<synchronous>, transform_indices = @transform_4, window_bounds = array<i64: 32, 192>}, {pipeline_mode = #tpu.pipeline_mode<synchronous>, transform_indices = @transform_5, window_bounds = array<i64: 64, 32>}, {pipeline_mode = #tpu.pipeline_mode<synchronous>, transform_indices = @transform_6, window_bounds = array<i64: 512, 32>}, {pipeline_mode = #tpu.pipeline_mode<synchronous>, transform_indices = @transform_7, window_bounds = array<i64: 32, 32>}, {pipeline_mode = #tpu.pipeline_mode<synchronous>, transform_indices = @transform_8, window_bounds = array<i64: 64, 32>}, {pipeline_mode = #tpu.pipeline_mode<synchronous>, transform_indices = @transform_9, window_bounds = array<i64: 32, 32>}, {pipeline_mode = #tpu.pipeline_mode<synchronous>, transform_indices = @transform_10, window_bounds = array<i64: 64, 32>}, {pipeline_mode = #tpu.pipeline_mode<synchronous>, transform_indices = @transform_11, window_bounds = array<i64: 32, 2>}, {transform_indices = @transform_12, window_bounds = array<i64: 1, 1, 2>}]} {
    %c0 = arith.constant 0 : index
    %c0_0 = arith.constant 0 : index
    %c0_1 = arith.constant 0 : index
    %0 = vector.load %arg1[%c0, %c0_0, %c0_1] : memref<1x16x128xf32, #tpu.memory_space<vmem>>, vector<1x16x128xf32>
    %1 = vector.shape_cast %0 : vector<1x16x128xf32> to vector<16x128xf32>
    %c0_2 = arith.constant 0 : index
    %c0_3 = arith.constant 0 : index
    %2 = vector.load %arg4[%c0_2, %c0_3] : memref<128x32xf32, #tpu.memory_space<vmem>>, vector<128x32xf32>
    %cst = arith.constant dense<0.000000e+00> : vector<16x32xf32>
    %3 = tpu.matmul %1, %2, %cst {dimension_numbers = #tpu.dot_dimension_numbers<[1], [0], [0], [1], [0, 0, 1, 1], [], []>} : vector<16x128xf32>, vector<128x32xf32>, vector<16x32xf32> -> vector<16x32xf32>
    %c0_4 = arith.constant 0 : index
    %c0_5 = arith.constant 0 : index
    %4 = vector.load %arg3[%c0_4, %c0_5] : memref<17x256xf32, #tpu.memory_space<vmem>>, vector<1x32xf32>
    %5 = vector.broadcast %4 : vector<1x32xf32> to vector<16x32xf32>
    %6 = arith.addf %3, %5 : vector<16x32xf32>
    %7 = arith.truncf %6 : vector<16x32xf32> to vector<16x32xbf16>
    %c0_6 = arith.constant 0 : index
    %c0_7 = arith.constant 0 : index
    %8 = vector.load %arg5[%c0_6, %c0_7] : memref<32x192xbf16, #tpu.memory_space<vmem>>, vector<32x192xbf16>
    %cst_8 = arith.constant dense<0.000000e+00> : vector<16x192xf32>
    %9 = tpu.matmul %7, %8, %cst_8 {dimension_numbers = #tpu.dot_dimension_numbers<[1], [0], [0], [1], [0, 0, 1, 1], [], []>} : vector<16x32xbf16>, vector<32x192xbf16>, vector<16x192xf32> -> vector<16x192xf32>
    %c1 = arith.constant 1 : index
    %c0_9 = arith.constant 0 : index
    %10 = vector.load %arg3[%c1, %c0_9] : memref<17x256xf32, #tpu.memory_space<vmem>>, vector<1x192xf32>
    %11 = vector.broadcast %10 : vector<1x192xf32> to vector<16x192xf32>
    %12 = arith.addf %9, %11 : vector<16x192xf32>
    %13 = vector.extract_strided_slice %12 {offsets = [0, 0], sizes = [16, 32], strides = [1, 1]} : vector<16x192xf32> to vector<16x32xf32>
    %14 = arith.truncf %13 : vector<16x32xf32> to vector<16x32xbf16>
    %15 = vector.extract_strided_slice %12 {offsets = [0, 64], sizes = [16, 32], strides = [1, 1]} : vector<16x192xf32> to vector<16x32xf32>
    %16 = arith.truncf %15 : vector<16x32xf32> to vector<16x32xbf16>
    %17 = vector.extract_strided_slice %12 {offsets = [0, 128], sizes = [16, 32], strides = [1, 1]} : vector<16x192xf32> to vector<16x32xf32>
    %18 = arith.truncf %17 : vector<16x32xf32> to vector<16x32xbf16>
    %cst_10 = arith.constant dense<0.000000e+00> : vector<16x16xf32>
    %19 = tpu.matmul %14, %16, %cst_10 {dimension_numbers = #tpu.dot_dimension_numbers<[1], [1], [0], [0], [0, 0, 1, 0], [], []>} : vector<16x32xbf16>, vector<16x32xbf16>, vector<16x16xf32> -> vector<16x16xf32>
    %cst_11 = arith.constant 0.176776692 : f32
    %20 = vector.broadcast %cst_11 : f32 to vector<16x16xf32>
    %21 = arith.mulf %19, %20 : vector<16x16xf32>
    %cst_12 = arith.constant dense<0xFF800000> : vector<16xf32>
    %22 = vector.multi_reduction <maximumf>, %21, %cst_12 [1] : vector<16x16xf32> to vector<16xf32>
    %23 = vector.shape_cast %22 : vector<16xf32> to vector<16x1xf32>
    %24 = vector.broadcast %23 : vector<16x1xf32> to vector<16x16xf32>
    %25 = arith.subf %21, %24 : vector<16x16xf32>
    %26 = math.exp %25 : vector<16x16xf32>
    %cst_13 = arith.constant dense<0.000000e+00> : vector<16xf32>
    %27 = vector.multi_reduction <add>, %26, %cst_13 [1] : vector<16x16xf32> to vector<16xf32>
    %28 = vector.shape_cast %27 : vector<16xf32> to vector<16x1xf32>
    %29 = tpu.reciprocal %28 {approx = true} : vector<16x1xf32> -> vector<16x1xf32>
    %30 = vector.broadcast %29 : vector<16x1xf32> to vector<16x16xf32>
    %31 = arith.mulf %26, %30 : vector<16x16xf32>
    %32 = arith.truncf %31 : vector<16x16xf32> to vector<16x16xbf16>
    %cst_14 = arith.constant dense<0.000000e+00> : vector<16x32xf32>
    %33 = tpu.matmul %32, %18, %cst_14 {dimension_numbers = #tpu.dot_dimension_numbers<[1], [0], [0], [1], [0, 0, 1, 1], [], []>} : vector<16x16xbf16>, vector<16x32xbf16>, vector<16x32xf32> -> vector<16x32xf32>
    %34 = vector.extract_strided_slice %12 {offsets = [0, 32], sizes = [16, 32], strides = [1, 1]} : vector<16x192xf32> to vector<16x32xf32>
    %35 = arith.truncf %34 : vector<16x32xf32> to vector<16x32xbf16>
    %36 = vector.extract_strided_slice %12 {offsets = [0, 96], sizes = [16, 32], strides = [1, 1]} : vector<16x192xf32> to vector<16x32xf32>
    %37 = arith.truncf %36 : vector<16x32xf32> to vector<16x32xbf16>
    %38 = vector.extract_strided_slice %12 {offsets = [0, 160], sizes = [16, 32], strides = [1, 1]} : vector<16x192xf32> to vector<16x32xf32>
    %39 = arith.truncf %38 : vector<16x32xf32> to vector<16x32xbf16>
    %cst_15 = arith.constant dense<0.000000e+00> : vector<16x16xf32>
    %40 = tpu.matmul %35, %37, %cst_15 {dimension_numbers = #tpu.dot_dimension_numbers<[1], [1], [0], [0], [0, 0, 1, 0], [], []>} : vector<16x32xbf16>, vector<16x32xbf16>, vector<16x16xf32> -> vector<16x16xf32>
    %cst_16 = arith.constant 0.176776692 : f32
    %41 = vector.broadcast %cst_16 : f32 to vector<16x16xf32>
    %42 = arith.mulf %40, %41 : vector<16x16xf32>
    %cst_17 = arith.constant dense<0xFF800000> : vector<16xf32>
    %43 = vector.multi_reduction <maximumf>, %42, %cst_17 [1] : vector<16x16xf32> to vector<16xf32>
    %44 = vector.shape_cast %43 : vector<16xf32> to vector<16x1xf32>
    %45 = vector.broadcast %44 : vector<16x1xf32> to vector<16x16xf32>
    %46 = arith.subf %42, %45 : vector<16x16xf32>
    %47 = math.exp %46 : vector<16x16xf32>
    %cst_18 = arith.constant dense<0.000000e+00> : vector<16xf32>
    %48 = vector.multi_reduction <add>, %47, %cst_18 [1] : vector<16x16xf32> to vector<16xf32>
    %49 = vector.shape_cast %48 : vector<16xf32> to vector<16x1xf32>
    %50 = tpu.reciprocal %49 {approx = true} : vector<16x1xf32> -> vector<16x1xf32>
    %51 = vector.broadcast %50 : vector<16x1xf32> to vector<16x16xf32>
    %52 = arith.mulf %47, %51 : vector<16x16xf32>
    %53 = arith.truncf %52 : vector<16x16xf32> to vector<16x16xbf16>
    %cst_19 = arith.constant dense<0.000000e+00> : vector<16x32xf32>
    %54 = tpu.matmul %53, %39, %cst_19 {dimension_numbers = #tpu.dot_dimension_numbers<[1], [0], [0], [1], [0, 0, 1, 1], [], []>} : vector<16x16xbf16>, vector<16x32xbf16>, vector<16x32xf32> -> vector<16x32xf32>
    %55 = tpu.concatenate %33, %54 in 1 : vector<16x32xf32>, vector<16x32xf32> -> vector<16x64xf32>
    %56 = arith.truncf %55 : vector<16x64xf32> to vector<16x64xbf16>
    %c0_20 = arith.constant 0 : index
    %c0_21 = arith.constant 0 : index
    %57 = vector.load %arg6[%c0_20, %c0_21] : memref<64x32xbf16, #tpu.memory_space<vmem>>, vector<64x32xbf16>
    %cst_22 = arith.constant dense<0.000000e+00> : vector<16x32xf32>
    %58 = tpu.matmul %56, %57, %cst_22 {dimension_numbers = #tpu.dot_dimension_numbers<[1], [0], [0], [1], [0, 0, 1, 1], [], []>} : vector<16x64xbf16>, vector<64x32xbf16>, vector<16x32xf32> -> vector<16x32xf32>
    %c2 = arith.constant 2 : index
    %c0_23 = arith.constant 0 : index
    %59 = vector.load %arg3[%c2, %c0_23] : memref<17x256xf32, #tpu.memory_space<vmem>>, vector<1x32xf32>
    %60 = vector.broadcast %59 : vector<1x32xf32> to vector<16x32xf32>
    %61 = arith.addf %58, %60 : vector<16x32xf32>
    %62 = arith.addf %61, %6 : vector<16x32xf32>
    %cst_24 = arith.constant dense<0.000000e+00> : vector<16xf32>
    %63 = vector.multi_reduction <add>, %62, %cst_24 [1] : vector<16x32xf32> to vector<16xf32>
    %64 = vector.shape_cast %63 : vector<16xf32> to vector<16x1xf32>
    %cst_25 = arith.constant 3.200000e+01 : f32
    %65 = vector.broadcast %cst_25 : f32 to vector<16x1xf32>
    %66 = arith.divf %64, %65 : vector<16x1xf32>
    %67 = vector.broadcast %66 : vector<16x1xf32> to vector<16x32xf32>
    %68 = arith.subf %62, %67 : vector<16x32xf32>
    %69 = arith.mulf %68, %68 : vector<16x32xf32>
    %cst_26 = arith.constant dense<0.000000e+00> : vector<16xf32>
    %70 = vector.multi_reduction <add>, %69, %cst_26 [1] : vector<16x32xf32> to vector<16xf32>
    %71 = vector.shape_cast %70 : vector<16xf32> to vector<16x1xf32>
    %cst_27 = arith.constant 3.200000e+01 : f32
    %72 = vector.broadcast %cst_27 : f32 to vector<16x1xf32>
    %73 = arith.divf %71, %72 : vector<16x1xf32>
    %c3 = arith.constant 3 : index
    %c0_28 = arith.constant 0 : index
    %74 = vector.load %arg3[%c3, %c0_28] : memref<17x256xf32, #tpu.memory_space<vmem>>, vector<1x32xf32>
    %75 = vector.broadcast %66 : vector<16x1xf32> to vector<16x32xf32>
    %76 = arith.subf %62, %75 : vector<16x32xf32>
    %cst_29 = arith.constant 9.99999996E-13 : f32
    %77 = vector.broadcast %cst_29 : f32 to vector<16x1xf32>
    %78 = arith.addf %73, %77 : vector<16x1xf32>
    %79 = math.rsqrt %78 : vector<16x1xf32>
    %80 = vector.broadcast %79 : vector<16x1xf32> to vector<16x32xf32>
    %81 = arith.mulf %76, %80 : vector<16x32xf32>
    %82 = vector.broadcast %74 : vector<1x32xf32> to vector<16x32xf32>
    %83 = arith.mulf %82, %81 : vector<16x32xf32>
    %c4 = arith.constant 4 : index
    %c0_30 = arith.constant 0 : index
    %84 = vector.load %arg3[%c4, %c0_30] : memref<17x256xf32, #tpu.memory_space<vmem>>, vector<1x32xf32>
    %85 = vector.broadcast %84 : vector<1x32xf32> to vector<16x32xf32>
    %86 = arith.addf %83, %85 : vector<16x32xf32>
    %87 = vector.extract_strided_slice %86 {offsets = [0, 0], sizes = [1, 32], strides = [1, 1]} : vector<16x32xf32> to vector<1x32xf32>
    %88 = vector.extract_strided_slice %86 {offsets = [1, 0], sizes = [1, 32], strides = [1, 1]} : vector<16x32xf32> to vector<1x32xf32>
    %89 = vector.extract_strided_slice %86 {offsets = [2, 0], sizes = [1, 32], strides = [1, 1]} : vector<16x32xf32> to vector<1x32xf32>
    %90 = vector.extract_strided_slice %86 {offsets = [3, 0], sizes = [1, 32], strides = [1, 1]} : vector<16x32xf32> to vector<1x32xf32>
    %91 = vector.extract_strided_slice %86 {offsets = [4, 0], sizes = [1, 32], strides = [1, 1]} : vector<16x32xf32> to vector<1x32xf32>
    %92 = vector.extract_strided_slice %86 {offsets = [5, 0], sizes = [1, 32], strides = [1, 1]} : vector<16x32xf32> to vector<1x32xf32>
    %93 = vector.extract_strided_slice %86 {offsets = [6, 0], sizes = [1, 32], strides = [1, 1]} : vector<16x32xf32> to vector<1x32xf32>
    %94 = vector.extract_strided_slice %86 {offsets = [7, 0], sizes = [1, 32], strides = [1, 1]} : vector<16x32xf32> to vector<1x32xf32>
    %95 = vector.extract_strided_slice %86 {offsets = [8, 0], sizes = [1, 32], strides = [1, 1]} : vector<16x32xf32> to vector<1x32xf32>
    %96 = vector.extract_strided_slice %86 {offsets = [9, 0], sizes = [1, 32], strides = [1, 1]} : vector<16x32xf32> to vector<1x32xf32>
    %97 = vector.extract_strided_slice %86 {offsets = [10, 0], sizes = [1, 32], strides = [1, 1]} : vector<16x32xf32> to vector<1x32xf32>
    %98 = vector.extract_strided_slice %86 {offsets = [11, 0], sizes = [1, 32], strides = [1, 1]} : vector<16x32xf32> to vector<1x32xf32>
    %99 = vector.extract_strided_slice %86 {offsets = [12, 0], sizes = [1, 32], strides = [1, 1]} : vector<16x32xf32> to vector<1x32xf32>
    %100 = vector.extract_strided_slice %86 {offsets = [13, 0], sizes = [1, 32], strides = [1, 1]} : vector<16x32xf32> to vector<1x32xf32>
    %101 = vector.extract_strided_slice %86 {offsets = [14, 0], sizes = [1, 32], strides = [1, 1]} : vector<16x32xf32> to vector<1x32xf32>
    %102 = vector.extract_strided_slice %86 {offsets = [15, 0], sizes = [1, 32], strides = [1, 1]} : vector<16x32xf32> to vector<1x32xf32>
    %103 = tpu.concatenate %87, %88, %89, %90, %91, %92, %93, %94, %95, %96, %97, %98, %99, %100, %101, %102 in 1 : vector<1x32xf32>, vector<1x32xf32>, vector<1x32xf32>, vector<1x32xf32>, vector<1x32xf32>, vector<1x32xf32>, vector<1x32xf32>, vector<1x32xf32>, vector<1x32xf32>, vector<1x32xf32>, vector<1x32xf32>, vector<1x32xf32>, vector<1x32xf32>, vector<1x32xf32>, vector<1x32xf32>, vector<1x32xf32> -> vector<1x512xf32>
    %104 = arith.truncf %103 : vector<1x512xf32> to vector<1x512xbf16>
    %c0_31 = arith.constant 0 : index
    %c0_32 = arith.constant 0 : index
    %105 = vector.load %arg7[%c0_31, %c0_32] : memref<512x32xbf16, #tpu.memory_space<vmem>>, vector<512x32xbf16>
    %cst_33 = arith.constant dense<0.000000e+00> : vector<1x32xf32>
    %106 = tpu.matmul %104, %105, %cst_33 {dimension_numbers = #tpu.dot_dimension_numbers<[1], [0], [0], [1], [0, 0, 1, 1], [], []>} : vector<1x512xbf16>, vector<512x32xbf16>, vector<1x32xf32> -> vector<1x32xf32>
    %c5 = arith.constant 5 : index
    %c0_34 = arith.constant 0 : index
    %107 = vector.load %arg3[%c5, %c0_34] : memref<17x256xf32, #tpu.memory_space<vmem>>, vector<1x32xf32>
    %108 = arith.addf %106, %107 : vector<1x32xf32>
    %c6 = arith.constant 6 : index
    %c0_35 = arith.constant 0 : index
    %109 = vector.load %arg3[%c6, %c0_35] : memref<17x256xf32, #tpu.memory_space<vmem>>, vector<1x32xf32>
    %110 = arith.mulf %108, %109 : vector<1x32xf32>
    %c7 = arith.constant 7 : index
    %c0_36 = arith.constant 0 : index
    %111 = vector.load %arg3[%c7, %c0_36] : memref<17x256xf32, #tpu.memory_space<vmem>>, vector<1x32xf32>
    %112 = arith.addf %110, %111 : vector<1x32xf32>
    %cst_37 = arith.constant 0.000000e+00 : f32
    %113 = vector.broadcast %cst_37 : f32 to vector<1x32xf32>
    %114 = arith.maximumf %112, %113 : vector<1x32xf32>
    %c0_38 = arith.constant 0 : index
    %c0_39 = arith.constant 0 : index
    %115 = vector.load %arg8[%c0_38, %c0_39] : memref<32x32xf32, #tpu.memory_space<vmem>>, vector<32x32xf32>
    %cst_40 = arith.constant dense<0.000000e+00> : vector<1x32xf32>
    %116 = tpu.matmul %114, %115, %cst_40 {dimension_numbers = #tpu.dot_dimension_numbers<[1], [0], [0], [1], [0, 0, 1, 1], [], []>} : vector<1x32xf32>, vector<32x32xf32>, vector<1x32xf32> -> vector<1x32xf32>
    %c8 = arith.constant 8 : index
    %c0_41 = arith.constant 0 : index
    %117 = vector.load %arg3[%c8, %c0_41] : memref<17x256xf32, #tpu.memory_space<vmem>>, vector<1x32xf32>
    %118 = arith.addf %116, %117 : vector<1x32xf32>
    %c0_42 = arith.constant 0 : index
    %c0_43 = arith.constant 0 : index
    %c0_44 = arith.constant 0 : index
    %119 = vector.load %arg2[%c0_42, %c0_43, %c0_44] : memref<1x1x64xf32, #tpu.memory_space<vmem>>, vector<1x1x64xf32>
    %120 = vector.shape_cast %119 : vector<1x1x64xf32> to vector<1x64xf32>
    %c0_45 = arith.constant 0 : index
    %c0_46 = arith.constant 0 : index
    %121 = vector.load %arg9[%c0_45, %c0_46] : memref<64x32xf32, #tpu.memory_space<vmem>>, vector<64x32xf32>
    %cst_47 = arith.constant dense<0.000000e+00> : vector<1x32xf32>
    %122 = tpu.matmul %120, %121, %cst_47 {dimension_numbers = #tpu.dot_dimension_numbers<[1], [0], [0], [1], [0, 0, 1, 1], [], []>} : vector<1x64xf32>, vector<64x32xf32>, vector<1x32xf32> -> vector<1x32xf32>
    %c9 = arith.constant 9 : index
    %c0_48 = arith.constant 0 : index
    %123 = vector.load %arg3[%c9, %c0_48] : memref<17x256xf32, #tpu.memory_space<vmem>>, vector<1x32xf32>
    %124 = arith.addf %122, %123 : vector<1x32xf32>
    %c10 = arith.constant 10 : index
    %c0_49 = arith.constant 0 : index
    %125 = vector.load %arg3[%c10, %c0_49] : memref<17x256xf32, #tpu.memory_space<vmem>>, vector<1x32xf32>
    %126 = arith.mulf %124, %125 : vector<1x32xf32>
    %c11 = arith.constant 11 : index
    %c0_50 = arith.constant 0 : index
    %127 = vector.load %arg3[%c11, %c0_50] : memref<17x256xf32, #tpu.memory_space<vmem>>, vector<1x32xf32>
    %128 = arith.addf %126, %127 : vector<1x32xf32>
    %cst_51 = arith.constant 0.000000e+00 : f32
    %129 = vector.broadcast %cst_51 : f32 to vector<1x32xf32>
    %130 = arith.maximumf %128, %129 : vector<1x32xf32>
    %c0_52 = arith.constant 0 : index
    %c0_53 = arith.constant 0 : index
    %131 = vector.load %arg10[%c0_52, %c0_53] : memref<32x32xf32, #tpu.memory_space<vmem>>, vector<32x32xf32>
    %cst_54 = arith.constant dense<0.000000e+00> : vector<1x32xf32>
    %132 = tpu.matmul %130, %131, %cst_54 {dimension_numbers = #tpu.dot_dimension_numbers<[1], [0], [0], [1], [0, 0, 1, 1], [], []>} : vector<1x32xf32>, vector<32x32xf32>, vector<1x32xf32> -> vector<1x32xf32>
    %c12 = arith.constant 12 : index
    %c0_55 = arith.constant 0 : index
    %133 = vector.load %arg3[%c12, %c0_55] : memref<17x256xf32, #tpu.memory_space<vmem>>, vector<1x32xf32>
    %134 = arith.addf %132, %133 : vector<1x32xf32>
    %135 = tpu.concatenate %118, %134 in 1 : vector<1x32xf32>, vector<1x32xf32> -> vector<1x64xf32>
    %c0_56 = arith.constant 0 : index
    %c0_57 = arith.constant 0 : index
    %136 = vector.load %arg11[%c0_56, %c0_57] : memref<64x32xf32, #tpu.memory_space<vmem>>, vector<64x32xf32>
    %cst_58 = arith.constant dense<0.000000e+00> : vector<1x32xf32>
    %137 = tpu.matmul %135, %136, %cst_58 {dimension_numbers = #tpu.dot_dimension_numbers<[1], [0], [0], [1], [0, 0, 1, 1], [], []>} : vector<1x64xf32>, vector<64x32xf32>, vector<1x32xf32> -> vector<1x32xf32>
    %c13 = arith.constant 13 : index
    %c0_59 = arith.constant 0 : index
    %138 = vector.load %arg3[%c13, %c0_59] : memref<17x256xf32, #tpu.memory_space<vmem>>, vector<1x32xf32>
    %139 = arith.addf %137, %138 : vector<1x32xf32>
    %c14 = arith.constant 14 : index
    %c0_60 = arith.constant 0 : index
    %140 = vector.load %arg3[%c14, %c0_60] : memref<17x256xf32, #tpu.memory_space<vmem>>, vector<1x32xf32>
    %141 = arith.mulf %139, %140 : vector<1x32xf32>
    %c15 = arith.constant 15 : index
    %c0_61 = arith.constant 0 : index
    %142 = vector.load %arg3[%c15, %c0_61] : memref<17x256xf32, #tpu.memory_space<vmem>>, vector<1x32xf32>
    %143 = arith.addf %141, %142 : vector<1x32xf32>
    %cst_62 = arith.constant 0.000000e+00 : f32
    %144 = vector.broadcast %cst_62 : f32 to vector<1x32xf32>
    %145 = arith.maximumf %143, %144 : vector<1x32xf32>
    %c0_63 = arith.constant 0 : index
    %c0_64 = arith.constant 0 : index
    %146 = vector.load %arg12[%c0_63, %c0_64] : memref<32x2xf32, #tpu.memory_space<vmem>>, vector<32x2xf32>
    %cst_65 = arith.constant dense<0.000000e+00> : vector<1x2xf32>
    %147 = tpu.matmul %145, %146, %cst_65 {dimension_numbers = #tpu.dot_dimension_numbers<[1], [0], [0], [1], [0, 0, 1, 1], [], []>} : vector<1x32xf32>, vector<32x2xf32>, vector<1x2xf32> -> vector<1x2xf32>
    %c16 = arith.constant 16 : index
    %c0_66 = arith.constant 0 : index
    %148 = vector.load %arg3[%c16, %c0_66] : memref<17x256xf32, #tpu.memory_space<vmem>>, vector<1x2xf32>
    %149 = arith.addf %147, %148 : vector<1x2xf32>
    %c0_67 = arith.constant 0 : index
    %c0_68 = arith.constant 0 : index
    %c0_69 = arith.constant 0 : index
    %150 = vector.load %arg13[%c0_67, %c0_68, %c0_69] : memref<1x1x2xf32, #tpu.memory_space<vmem>>, vector<1x1x2xf32>
    %151 = vector.shape_cast %150 : vector<1x1x2xf32> to vector<1x2xf32>
    %152 = vector.shape_cast %149 : vector<1x2xf32> to vector<1x1x2xf32>
    tpu.vector_store %arg13[%c0_67, %c0_68, %c0_69], %152 {strides = array<i32>} : memref<1x1x2xf32, #tpu.memory_space<vmem>>, vector<1x1x2xf32>,
    return
  }
  func.func @transform_0(%arg0: i32) -> (i32, i32, i32) {
    %c0_i32 = arith.constant 0 : i32
    %c0_i32_0 = arith.constant 0 : i32
    %c0_i32_1 = arith.constant 0 : i32
    return %arg0, %c0_i32, %c0_i32_0 : i32, i32, i32
  }
  func.func @transform_1(%arg0: i32) -> (i32, i32, i32) {
    %c0_i32 = arith.constant 0 : i32
    %c0_i32_0 = arith.constant 0 : i32
    %c0_i32_1 = arith.constant 0 : i32
    return %arg0, %c0_i32, %c0_i32_0 : i32, i32, i32
  }
  func.func @transform_2(%arg0: i32) -> (i32, i32) {
    %c0_i32 = arith.constant 0 : i32
    %c0_i32_0 = arith.constant 0 : i32
    %c0_i32_1 = arith.constant 0 : i32
    return %c0_i32, %c0_i32_0 : i32, i32
  }
  func.func @transform_3(%arg0: i32) -> (i32, i32) {
    %c0_i32 = arith.constant 0 : i32
    %c0_i32_0 = arith.constant 0 : i32
    %c0_i32_1 = arith.constant 0 : i32
    return %c0_i32, %c0_i32_0 : i32, i32
  }
  func.func @transform_4(%arg0: i32) -> (i32, i32) {
    %c0_i32 = arith.constant 0 : i32
    %c0_i32_0 = arith.constant 0 : i32
    %c0_i32_1 = arith.constant 0 : i32
    return %c0_i32, %c0_i32_0 : i32, i32
  }
  func.func @transform_5(%arg0: i32) -> (i32, i32) {
    %c0_i32 = arith.constant 0 : i32
    %c0_i32_0 = arith.constant 0 : i32
    %c0_i32_1 = arith.constant 0 : i32
    return %c0_i32, %c0_i32_0 : i32, i32
  }
  func.func @transform_6(%arg0: i32) -> (i32, i32) {
    %c0_i32 = arith.constant 0 : i32
    %c0_i32_0 = arith.constant 0 : i32
    %c0_i32_1 = arith.constant 0 : i32
    return %c0_i32, %c0_i32_0 : i32, i32
  }
  func.func @transform_7(%arg0: i32) -> (i32, i32) {
    %c0_i32 = arith.constant 0 : i32
    %c0_i32_0 = arith.constant 0 : i32
    %c0_i32_1 = arith.constant 0 : i32
    return %c0_i32, %c0_i32_0 : i32, i32
  }
  func.func @transform_8(%arg0: i32) -> (i32, i32) {
    %c0_i32 = arith.constant 0 : i32
    %c0_i32_0 = arith.constant 0 : i32
    %c0_i32_1 = arith.constant 0 : i32
    return %c0_i32, %c0_i32_0 : i32, i32
  }
  func.func @transform_9(%arg0: i32) -> (i32, i32) {
    %c0_i32 = arith.constant 0 : i32
    %c0_i32_0 = arith.constant 0 : i32
    %c0_i32_1 = arith.constant 0 : i32
    return %c0_i32, %c0_i32_0 : i32, i32
  }
  func.func @transform_10(%arg0: i32) -> (i32, i32) {
    %c0_i32 = arith.constant 0 : i32
    %c0_i32_0 = arith.constant 0 : i32
    %c0_i32_1 = arith.constant 0 : i32
    return %c0_i32, %c0_i32_0 : i32, i32
  }
  func.func @transform_11(%arg0: i32) -> (i32, i32) {
    %c0_i32 = arith.constant 0 : i32
    %c0_i32_0 = arith.constant 0 : i32
    %c0_i32_1 = arith.constant 0 : i32
    return %c0_i32, %c0_i32_0 : i32, i32
  }
  func.func @transform_12(%arg0: i32) -> (i32, i32, i32) {
    %c0_i32 = arith.constant 0 : i32
    %c0_i32_0 = arith.constant 0 : i32
    %c0_i32_1 = arith.constant 0 : i32
    return %arg0, %c0_i32, %c0_i32_0 : i32, i32, i32
  }
}

</mosaic_0001>

<llo_original>
// kernel: protein_crystallization_forward.1
$region0: #{protein_crystallization_forward.1}
  #allocation0 [shape = 'u32[]', space=smem, size = 0x4, offset = 0x4, fixed_abs, tag = 'smem constant byte address 0x4 - core index']
  #allocation1 [shape = 'u32[144,128]{1,0:T(1,128)}', space=vmem, size = 0x12000, scoped, tag = 'internal scratch']
  %s0 = inlined_call_operand.vmem [shape: f32[2,16,128], index: 0, kind: input, shape index: {}]
  %s1 = inlined_call_operand.vmem [shape: f32[2,1,64], index: 1, kind: input, shape index: {}]
  %s2 = inlined_call_operand.vmem [shape: f32[17,256], index: 2, kind: input, shape index: {}]
  %s3 = inlined_call_operand.vmem [shape: f32[128,32], index: 3, kind: input, shape index: {}]
  %s4 = inlined_call_operand.vmem [shape: bf16[32,192], index: 4, kind: input, shape index: {}]
  %s5 = inlined_call_operand.vmem [shape: bf16[64,32], index: 5, kind: input, shape index: {}]
  %s6 = inlined_call_operand.vmem [shape: bf16[512,32], index: 6, kind: input, shape index: {}]
  %s7 = inlined_call_operand.vmem [shape: f32[32,32], index: 7, kind: input, shape index: {}]
  %s8 = inlined_call_operand.vmem [shape: f32[64,32], index: 8, kind: input, shape index: {}]
  %s9 = inlined_call_operand.vmem [shape: f32[32,32], index: 9, kind: input, shape index: {}]
  %s10 = inlined_call_operand.vmem [shape: f32[64,32], index: 10, kind: input, shape index: {}]
  %s11 = inlined_call_operand.vmem [shape: f32[32,2], index: 11, kind: input, shape index: {}]
  %s12 = inlined_call_operand.hbm [shape: f32[2,1,2], index: 12, kind: output, shape index: {}]
  %s13 = sld [smem:[#allocation0]]
  $region81: #{protein_crystallization_forward.1} parent=0
    _
  %s15 = ssub.s32 1, %s13
  %s16 = scalar_select 0, %s15, %s13
  $region1: #{protein_crystallization_forward.1} parent=0
    #allocation2 [shape = 'u8[1024]{0}', space=vmem, size = 0x400, scoped, tag = 'output window, operand 0']
    #allocation3 [shape = 's32[2]{0}', space=sflag, size = 0x8, scoped, tag = 'scoped memory for protein_crystallization_forward.1']
    %17 = vsyncpa [#allocation3], 0
    %s18 = scalar_lea.sflag [#allocation3], 1
    %19 = vsyncpa %s18, 0
    loop: start=0, step=1, limit=4
    $region2: #{protein_crystallization_forward.1} parent=1 // loop_pre_header
      _
    $region3: #{protein_crystallization_forward.1} parent=1 // loop_header
      %s21 = sphi 0, %s25
      %p22 = scmp.ge.s32.totalorder %s21, 4
      %s31 = sphi 0, %s33
      %s34 = sphi 0, %s31
      %s35 = sphi 0, %s34
      %s51 = sphi 0, %s35
      %s57 = sphi 0, %s59
      %s60 = sphi 0, %s57
      %s61 = sphi 0, %s60
      %s77 = sphi 0, %s61
      %s81 = sphi 0, %s81
      %s83 = sphi 0, %s81
      %s84 = sphi 0, %s83
      %s98 = sphi 0, %s84
      %s102 = sphi 0, %s102
      %s104 = sphi 0, %s102
      %s105 = sphi 0, %s104
      %s119 = sphi 0, %s105
      %s123 = sphi 0, %s123
      %s125 = sphi 0, %s123
      %s126 = sphi 0, %s125
      %s140 = sphi 0, %s126
      %s144 = sphi 0, %s144
      %s146 = sphi 0, %s144
      %s147 = sphi 0, %s146
      %s161 = sphi 0, %s147
      %s165 = sphi 0, %s165
      %s167 = sphi 0, %s165
      %s168 = sphi 0, %s167
      %s182 = sphi 0, %s168
      %s186 = sphi 0, %s186
      %s188 = sphi 0, %s186
      %s189 = sphi 0, %s188
      %s203 = sphi 0, %s189
      %s207 = sphi 0, %s207
      %s209 = sphi 0, %s207
      %s210 = sphi 0, %s209
      %s224 = sphi 0, %s210
      %s228 = sphi 0, %s228
      %s230 = sphi 0, %s228
      %s231 = sphi 0, %s230
      %s245 = sphi 0, %s231
      %s249 = sphi 0, %s249
      %s251 = sphi 0, %s249
      %s252 = sphi 0, %s251
      %s266 = sphi 0, %s252
      %s270 = sphi 0, %s270
      %s272 = sphi 0, %s270
      %s273 = sphi 0, %s272
      %s287 = sphi 0, %s273
      %s293 = sphi 0, %s295
      %s296 = sphi 0, %s293
      %s297 = sphi 0, %s296
      %s313 = sphi 0, %s297
    $region4: #{protein_crystallization_forward.1} parent=1 // loop_header_branch
      %24 = sbr.rel (%p22) target = $region8
    $region5: #{protein_crystallization_forward.1} parent=1 // loop_body
      %s26 = ssub.s32 %s21, 1
      %s27 = ssub.s32 %s21, 2
      %s28 = sadd.s32 %s21, 1
      %s29 = ssub.s32 %s21, %s28
      %p30 = scmp.eq.s32.totalorder %s29, 0
      %s32 = sadd.s32 %s31, 1
      %s33 = scalar_select %p30, %s31, %s32
      %p36 = pneg %p30
      %p37 = scmp.eq.s32.totalorder %s21, 1
      %p38 = por %p36, %p37
      %p39 = scmp.ne.s32.totalorder %s31, %s34
      %p40 = scmp.eq.s32.totalorder %s21, 0
      %p41 = por %p39, %p40
      %p42 = scmp.ne.s32.totalorder %s31, %s34
      %p43 = scmp.eq.s32.totalorder %s26, 1
      %p44 = por %p42, %p43
      %p45 = scmp.ne.s32.totalorder %s34, %s35
      %p46 = scmp.eq.s32.totalorder %s26, 0
      %p47 = por %p45, %p46
      %p48 = scmp.ne.s32.totalorder %s34, %s35
      %p49 = scmp.eq.s32.totalorder %s27, 1
      %p50 = por %p48, %p49
      %p52 = scmp.ne.s32.totalorder %s35, %s51
      %p53 = scmp.eq.s32.totalorder %s27, 0
      %p54 = por %p52, %p53
      %s55 = ssub.s32 %s21, %s28
      %p56 = scmp.eq.s32.totalorder %s55, 0
      %s58 = sadd.s32 %s57, 1
      %s59 = scalar_select %p56, %s57, %s58
      %p62 = pneg %p56
      %p63 = scmp.eq.s32.totalorder %s21, 1
      %p64 = por %p62, %p63
      %p65 = scmp.ne.s32.totalorder %s57, %s60
      %p66 = scmp.eq.s32.totalorder %s21, 0
      %p67 = por %p65, %p66
      %p68 = scmp.ne.s32.totalorder %s57, %s60
      %p69 = scmp.eq.s32.totalorder %s26, 1
      %p70 = por %p68, %p69
      %p71 = scmp.ne.s32.totalorder %s60, %s61
      %p72 = scmp.eq.s32.totalorder %s26, 0
      %p73 = por %p71, %p72
      %p74 = scmp.ne.s32.totalorder %s60, %s61
      %p75 = scmp.eq.s32.totalorder %s27, 1
      %p76 = por %p74, %p75
      %p78 = scmp.ne.s32.totalorder %s61, %s77
      %p79 = scmp.eq.s32.totalorder %s27, 0
      %p80 = por %p78, %p79
      %s82 = sadd.s32 %s81, 1
      %p85 = scmp.eq.s32.totalorder %s21, 1
      %p86 = scmp.ne.s32.totalorder %s81, %s83
      %p87 = scmp.eq.s32.totalorder %s21, 0
      %p88 = por %p86, %p87
      %p89 = scmp.ne.s32.totalorder %s81, %s83
      %p90 = scmp.eq.s32.totalorder %s26, 1
      %p91 = por %p89, %p90
      %p92 = scmp.ne.s32.totalorder %s83, %s84
      %p93 = scmp.eq.s32.totalorder %s26, 0
      %p94 = por %p92, %p93
      %p95 = scmp.ne.s32.totalorder %s83, %s84
      %p96 = scmp.eq.s32.totalorder %s27, 1
      %p97 = por %p95, %p96
      %p99 = scmp.ne.s32.totalorder %s84, %s98
      %p100 = scmp.eq.s32.totalorder %s27, 0
      %p101 = por %p99, %p100
      %s103 = sadd.s32 %s102, 1
      %p106 = scmp.eq.s32.totalorder %s21, 1
      %p107 = scmp.ne.s32.totalorder %s102, %s104
      %p108 = scmp.eq.s32.totalorder %s21, 0
      %p109 = por %p107, %p108
      %p110 = scmp.ne.s32.totalorder %s102, %s104
      %p111 = scmp.eq.s32.totalorder %s26, 1
      %p112 = por %p110, %p111
      %p113 = scmp.ne.s32.totalorder %s104, %s105
      %p114 = scmp.eq.s32.totalorder %s26, 0
      %p115 = por %p113, %p114
      %p116 = scmp.ne.s32.totalorder %s104, %s105
      %p117 = scmp.eq.s32.totalorder %s27, 1
      %p118 = por %p116, %p117
      %p120 = scmp.ne.s32.totalorder %s105, %s119
      %p121 = scmp.eq.s32.totalorder %s27, 0
      %p122 = por %p120, %p121
      %s124 = sadd.s32 %s123, 1
      %p127 = scmp.eq.s32.totalorder %s21, 1
      %p128 = scmp.ne.s32.totalorder %s123, %s125
      %p129 = scmp.eq.s32.totalorder %s21, 0
      %p130 = por %p128, %p129
      %p131 = scmp.ne.s32.totalorder %s123, %s125
      %p132 = scmp.eq.s32.totalorder %s26, 1
      %p133 = por %p131, %p132
      %p134 = scmp.ne.s32.totalorder %s125, %s126
      %p135 = scmp.eq.s32.totalorder %s26, 0
      %p136 = por %p134, %p135
      %p137 = scmp.ne.s32.totalorder %s125, %s126
      %p138 = scmp.eq.s32.totalorder %s27, 1
      %p139 = por %p137, %p138
      %p141 = scmp.ne.s32.totalorder %s126, %s140
      %p142 = scmp.eq.s32.totalorder %s27, 0
      %p143 = por %p141, %p142
      %s145 = sadd.s32 %s144, 1
      %p148 = scmp.eq.s32.totalorder %s21, 1
      %p149 = scmp.ne.s32.totalorder %s144, %s146
      %p150 = scmp.eq.s32.totalorder %s21, 0
      %p151 = por %p149, %p150
      %p152 = scmp.ne.s32.totalorder %s144, %s146
      %p153 = scmp.eq.s32.totalorder %s26, 1
      %p154 = por %p152, %p153
      %p155 = scmp.ne.s32.totalorder %s146, %s147
      %p156 = scmp.eq.s32.totalorder %s26, 0
      %p157 = por %p155, %p156
      %p158 = scmp.ne.s32.totalorder %s146, %s147
      %p159 = scmp.eq.s32.totalorder %s27, 1
      %p160 = por %p158, %p159
      %p162 = scmp.ne.s32.totalorder %s147, %s161
      %p163 = scmp.eq.s32.totalorder %s27, 0
      %p164 = por %p162, %p163
      %s166 = sadd.s32 %s165, 1
      %p169 = scmp.eq.s32.totalorder %s21, 1
      %p170 = scmp.ne.s32.totalorder %s165, %s167
      %p171 = scmp.eq.s32.totalorder %s21, 0
      %p172 = por %p170, %p171
      %p173 = scmp.ne.s32.totalorder %s165, %s167
      %p174 = scmp.eq.s32.totalorder %s26, 1
      %p175 = por %p173, %p174
      %p176 = scmp.ne.s32.totalorder %s167, %s168
      %p177 = scmp.eq.s32.totalorder %s26, 0
      %p178 = por %p176, %p177
      %p179 = scmp.ne.s32.totalorder %s167, %s168
      %p180 = scmp.eq.s32.totalorder %s27, 1
      %p181 = por %p179, %p180
      %p183 = scmp.ne.s32.totalorder %s168, %s182
      %p184 = scmp.eq.s32.totalorder %s27, 0
      %p185 = por %p183, %p184
      %s187 = sadd.s32 %s186, 1
      %p190 = scmp.eq.s32.totalorder %s21, 1
      %p191 = scmp.ne.s32.totalorder %s186, %s188
      %p192 = scmp.eq.s32.totalorder %s21, 0
      %p193 = por %p191, %p192
      %p194 = scmp.ne.s32.totalorder %s186, %s188
      %p195 = scmp.eq.s32.totalorder %s26, 1
      %p196 = por %p194, %p195
      %p197 = scmp.ne.s32.totalorder %s188, %s189
      %p198 = scmp.eq.s32.totalorder %s26, 0
      %p199 = por %p197, %p198
      %p200 = scmp.ne.s32.totalorder %s188, %s189
      %p201 = scmp.eq.s32.totalorder %s27, 1
      %p202 = por %p200, %p201
      %p204 = scmp.ne.s32.totalorder %s189, %s203
      %p205 = scmp.eq.s32.totalorder %s27, 0
      %p206 = por %p204, %p205
      %s208 = sadd.s32 %s207, 1
      %p211 = scmp.eq.s32.totalorder %s21, 1
      %p212 = scmp.ne.s32.totalorder %s207, %s209
      %p213 = scmp.eq.s32.totalorder %s21, 0
      %p214 = por %p212, %p213
      %p215 = scmp.ne.s32.totalorder %s207, %s209
      %p216 = scmp.eq.s32.totalorder %s26, 1
      %p217 = por %p215, %p216
      %p218 = scmp.ne.s32.totalorder %s209, %s210
      %p219 = scmp.eq.s32.totalorder %s26, 0
      %p220 = por %p218, %p219
      %p221 = scmp.ne.s32.totalorder %s209, %s210
      %p222 = scmp.eq.s32.totalorder %s27, 1
      %p223 = por %p221, %p222
      %p225 = scmp.ne.s32.totalorder %s210, %s224
      %p226 = scmp.eq.s32.totalorder %s27, 0
      %p227 = por %p225, %p226
      %s229 = sadd.s32 %s228, 1
      %p232 = scmp.eq.s32.totalorder %s21, 1
      %p233 = scmp.ne.s32.totalorder %s228, %s230
      %p234 = scmp.eq.s32.totalorder %s21, 0
      %p235 = por %p233, %p234
      %p236 = scmp.ne.s32.totalorder %s228, %s230
      %p237 = scmp.eq.s32.totalorder %s26, 1
      %p238 = por %p236, %p237
      %p239 = scmp.ne.s32.totalorder %s230, %s231
      %p240 = scmp.eq.s32.totalorder %s26, 0
      %p241 = por %p239, %p240
      %p242 = scmp.ne.s32.totalorder %s230, %s231
      %p243 = scmp.eq.s32.totalorder %s27, 1
      %p244 = por %p242, %p243
      %p246 = scmp.ne.s32.totalorder %s231, %s245
      %p247 = scmp.eq.s32.totalorder %s27, 0
      %p248 = por %p246, %p247
      %s250 = sadd.s32 %s249, 1
      %p253 = scmp.eq.s32.totalorder %s21, 1
      %p254 = scmp.ne.s32.totalorder %s249, %s251
      %p255 = scmp.eq.s32.totalorder %s21, 0
      %p256 = por %p254, %p255
      %p257 = scmp.ne.s32.totalorder %s249, %s251
      %p258 = scmp.eq.s32.totalorder %s26, 1
      %p259 = por %p257, %p258
      %p260 = scmp.ne.s32.totalorder %s251, %s252
      %p261 = scmp.eq.s32.totalorder %s26, 0
      %p262 = por %p260, %p261
      %p263 = scmp.ne.s32.totalorder %s251, %s252
      %p264 = scmp.eq.s32.totalorder %s27, 1
      %p265 = por %p263, %p264
      %p267 = scmp.ne.s32.totalorder %s252, %s266
      %p268 = scmp.eq.s32.totalorder %s27, 0
      %p269 = por %p267, %p268
      %s271 = sadd.s32 %s270, 1
      %p274 = scmp.eq.s32.totalorder %s21, 1
      %p275 = scmp.ne.s32.totalorder %s270, %s272
      %p276 = scmp.eq.s32.totalorder %s21, 0
      %p277 = por %p275, %p276
      %p278 = scmp.ne.s32.totalorder %s270, %s272
      %p279 = scmp.eq.s32.totalorder %s26, 1
      %p280 = por %p278, %p279
      %p281 = scmp.ne.s32.totalorder %s272, %s273
      %p282 = scmp.eq.s32.totalorder %s26, 0
      %p283 = por %p281, %p282
      %p284 = scmp.ne.s32.totalorder %s272, %s273
      %p285 = scmp.eq.s32.totalorder %s27, 1
      %p286 = por %p284, %p285
      %p288 = scmp.ne.s32.totalorder %s273, %s287
      %p289 = scmp.eq.s32.totalorder %s27, 0
      %p290 = por %p288, %p289
      %s291 = ssub.s32 %s21, %s28
      %p292 = scmp.eq.s32.totalorder %s291, 0
      %s294 = sadd.s32 %s293, 1
      %s295 = scalar_select %p292, %s293, %s294
      %p298 = pneg %p292
      %p299 = scmp.eq.s32.totalorder %s21, 1
      %p300 = por %p298, %p299
      %p301 = scmp.ne.s32.totalorder %s293, %s296
      %p302 = scmp.eq.s32.totalorder %s21, 0
      %p303 = por %p301, %p302
      %p304 = scmp.ne.s32.totalorder %s293, %s296
      %p305 = scmp.eq.s32.totalorder %s26, 1
      %p306 = por %p304, %p305
      %p307 = scmp.ne.s32.totalorder %s296, %s297
      %p308 = scmp.eq.s32.totalorder %s26, 0
      %p309 = por %p307, %p308
      %p310 = scmp.ne.s32.totalorder %s296, %s297
      %p311 = scmp.eq.s32.totalorder %s27, 1
      %p312 = por %p310, %p311
      %p314 = scmp.ne.s32.totalorder %s297, %s313
      %p315 = scmp.eq.s32.totalorder %s27, 0
      %p316 = por %p314, %p315
      %p317 = scmp.le.s32.totalorder 1, %s21
      %p318 = scmp.lt.s32.totalorder %s21, 3
      %p319 = pnand %p317, %p318
      %p320 = pneg %p319
      // Predicated region
      $region9: #{protein_crystallization_forward.1} parent=5 // pred_check
        _
      $region10: #{protein_crystallization_forward.1} parent=5 // pred_check_branch
        %322 = sbr.rel (%p319) target = $region12
      $region11: #{protein_crystallization_forward.1} parent=5 // pred_region
        %s323 = ssub.s32 %s21, 1
        // Predicated region
        $region13: #{protein_crystallization_forward.1} parent=11 // pred_check
          %p324 = pneg %p94
        $region14: #{protein_crystallization_forward.1} parent=11 // pred_check_branch
          %326 = sbr.rel (%p324) target = $region16
        $region15: #{protein_crystallization_forward.1} parent=11 // pred_region
          _
        $region16: #{protein_crystallization_forward.1} parent=11 // pred_fallthru
          _
        // Predicated region
        $region17: #{protein_crystallization_forward.1} parent=11 // pred_check
          %p327 = pneg %p115
        $region18: #{protein_crystallization_forward.1} parent=11 // pred_check_branch
          %329 = sbr.rel (%p327) target = $region20
        $region19: #{protein_crystallization_forward.1} parent=11 // pred_region
          _
        $region20: #{protein_crystallization_forward.1} parent=11 // pred_fallthru
          _
        // Predicated region
        $region21: #{protein_crystallization_forward.1} parent=11 // pred_check
          %p330 = pneg %p136
        $region22: #{protein_crystallization_forward.1} parent=11 // pred_check_branch
          %332 = sbr.rel (%p330) target = $region24
        $region23: #{protein_crystallization_forward.1} parent=11 // pred_region
          _
        $region24: #{protein_crystallization_forward.1} parent=11 // pred_fallthru
          _
        // Predicated region
        $region25: #{protein_crystallization_forward.1} parent=11 // pred_check
          %p333 = pneg %p157
        $region26: #{protein_crystallization_forward.1} parent=11 // pred_check_branch
          %335 = sbr.rel (%p333) target = $region28
        $region27: #{protein_crystallization_forward.1} parent=11 // pred_region
          _
        $region28: #{protein_crystallization_forward.1} parent=11 // pred_fallthru
          _
        // Predicated region
        $region29: #{protein_crystallization_forward.1} parent=11 // pred_check
          %p336 = pneg %p178
        $region30: #{protein_crystallization_forward.1} parent=11 // pred_check_branch
          %338 = sbr.rel (%p336) target = $region32
        $region31: #{protein_crystallization_forward.1} parent=11 // pred_region
          _
        $region32: #{protein_crystallization_forward.1} parent=11 // pred_fallthru
          _
        // Predicated region
        $region33: #{protein_crystallization_forward.1} parent=11 // pred_check
          %p339 = pneg %p199
        $region34: #{protein_crystallization_forward.1} parent=11 // pred_check_branch
          %341 = sbr.rel (%p339) target = $region36
        $region35: #{protein_crystallization_forward.1} parent=11 // pred_region
          _
        $region36: #{protein_crystallization_forward.1} parent=11 // pred_fallthru
          _
        // Predicated region
        $region37: #{protein_crystallization_forward.1} parent=11 // pred_check
          %p342 = pneg %p220
        $region38: #{protein_crystallization_forward.1} parent=11 // pred_check_branch
          %344 = sbr.rel (%p342) target = $region40
        $region39: #{protein_crystallization_forward.1} parent=11 // pred_region
          _
        $region40: #{protein_crystallization_forward.1} parent=11 // pred_fallthru
          _
        // Predicated region
        $region41: #{protein_crystallization_forward.1} parent=11 // pred_check
          %p345 = pneg %p241
        $region42: #{protein_crystallization_forward.1} parent=11 // pred_check_branch
          %347 = sbr.rel (%p345) target = $region44
        $region43: #{protein_crystallization_forward.1} parent=11 // pred_region
          _
        $region44: #{protein_crystallization_forward.1} parent=11 // pred_fallthru
          _
        // Predicated region
        $region45: #{protein_crystallization_forward.1} parent=11 // pred_check
          %p348 = pneg %p262
        $region46: #{protein_crystallization_forward.1} parent=11 // pred_check_branch
          %350 = sbr.rel (%p348) target = $region48
        $region47: #{protein_crystallization_forward.1} parent=11 // pred_region
          _
        $region48: #{protein_crystallization_forward.1} parent=11 // pred_fallthru
          _
        // Predicated region
        $region49: #{protein_crystallization_forward.1} parent=11 // pred_check
          %p351 = pneg %p283
        $region50: #{protein_crystallization_forward.1} parent=11 // pred_check_branch
          %353 = sbr.rel (%p351) target = $region52
        $region51: #{protein_crystallization_forward.1} parent=11 // pred_region
          _
        $region52: #{protein_crystallization_forward.1} parent=11 // pred_fallthru
          _
      $region12: #{protein_crystallization_forward.1} parent=5 // pred_fallthru
        _
      %p354 = scmp.lt.s32.totalorder %s21, 2
      // Predicated region
      $region53: #{protein_crystallization_forward.1} parent=5 // pred_check
        %p355 = pneg %p354
      $region54: #{protein_crystallization_forward.1} parent=5 // pred_check_branch
        %357 = sbr.rel (%p355) target = $region56
      $region55: #{protein_crystallization_forward.1} parent=5 // pred_region
        // Predicated region
        $region57: #{protein_crystallization_forward.1} parent=55 // pred_check
          %p358 = pneg %p41
        $region58: #{protein_crystallization_forward.1} parent=55 // pred_check_branch
          %360 = sbr.rel (%p358) target = $region60
        $region59: #{protein_crystallization_forward.1} parent=55 // pred_region
          %p361 = scmp.lt.s32.totalorder %s21, 1
          %s362 = scalar_select %p361, %s21, 1
          %s363 = smul.addr %s362, 2
          %s364 = smul.addr %s363, 8
          %s365 = scalar_lea.vmem %s0, %s364
        $region60: #{protein_crystallization_forward.1} parent=55 // pred_fallthru
          _
        // Predicated region
        $region61: #{protein_crystallization_forward.1} parent=55 // pred_check
          %p366 = pneg %p67
        $region62: #{protein_crystallization_forward.1} parent=55 // pred_check_branch
          %368 = sbr.rel (%p366) target = $region64
        $region63: #{protein_crystallization_forward.1} parent=55 // pred_region
          %p369 = scmp.lt.s32.totalorder %s21, 1
          %s370 = scalar_select %p369, %s21, 1
          %s371 = scalar_lea.vmem %s1, %s370
        $region64: #{protein_crystallization_forward.1} parent=55 // pred_fallthru
          _
      $region56: #{protein_crystallization_forward.1} parent=5 // pred_fallthru
        _
      %p372 = scmp.le.s32.totalorder 1, %s21
      %p373 = scmp.lt.s32.totalorder %s21, 3
      %p374 = pnand %p372, %p373
      %p375 = pneg %p374
      // Predicated region
      $region65: #{protein_crystallization_forward.1} parent=5 // pred_check
        _
      $region66: #{protein_crystallization_forward.1} parent=5 // pred_check_branch
        %377 = sbr.rel (%p374) target = $region68
      $region67: #{protein_crystallization_forward.1} parent=5 // pred_region
        %s378 = ssub.s32 %s21, 1
        %p379 = scmp.lt.s32.totalorder %s26, 1
        %s380 = scalar_select %p379, %s26, 1
        %s381 = smul.addr %s380, 2
        %s382 = smul.addr %s381, 8
        %s383 = scalar_lea.vmem %s0, %s382
        %p384 = pneg %p47
        %p385 = pneg %p44
        %p386 = scmp.lt.s32.totalorder %s26, 1
        %s387 = scalar_select %p386, %s26, 1
        %s388 = scalar_lea.vmem %s1, %s387
        %p389 = pneg %p73
        %p390 = pneg %p70
        %p391 = pneg %p94
        %p392 = pneg %p91
        %p393 = pneg %p115
        %p394 = pneg %p112
        %p395 = pneg %p136
        %p396 = pneg %p133
        %p397 = pneg %p157
        %p398 = pneg %p154
        %p399 = pneg %p178
        %p400 = pneg %p175
        %p401 = pneg %p199
        %p402 = pneg %p196
        %p403 = pneg %p220
        %p404 = pneg %p217
        %p405 = pneg %p241
        %p406 = pneg %p238
        %p407 = pneg %p262
        %p408 = pneg %p259
        %p409 = pneg %p283
        %p410 = pneg %p280
        %p411 = pneg %p309
        %p412 = pneg %p306
        %s413 = sand.u32 %s296, 1
        %s414 = scalar_lea.sflag [#allocation3], %s413
        %s415 = sand.u32 %s296, 1
        %s416 = scalar_lea.vmem [#allocation2], %s415
        %p417 = scmp.lt.s32.totalorder %s26, 1
        %s418 = scalar_select %p417, %s26, 1
        %s419 = smul.addr %s418, 2
        %s420 = smul.addr %s419, 8
        %s421 = scalar_lea.vmem %s0, %s420
        %p422 = scmp.lt.s32.totalorder %s26, 1
        %s423 = scalar_select %p422, %s26, 1
        %s424 = scalar_lea.vmem %s1, %s423
        %v426 = vld [vmem:[%s421] sm:$0xff]
        %v427 = vld [vmem:[%s421 + $0x8] sm:$0xff]
        %v428 = vld [vmem:[%s3] sm:$0xff]
        %v429 = vld [vmem:[%s3 + $0x8] sm:$0xff]
        %v430 = vld [vmem:[%s3 + $0x10] sm:$0xff]
        %v431 = vld [vmem:[%s3 + $0x18] sm:$0xff]
        %v432 = vld [vmem:[%s3 + $0x20] sm:$0xff]
        %v433 = vld [vmem:[%s3 + $0x28] sm:$0xff]
        %v434 = vld [vmem:[%s3 + $0x30] sm:$0xff]
        %v435 = vld [vmem:[%s3 + $0x38] sm:$0xff]
        %v436 = vld [vmem:[%s3 + $0x40] sm:$0xff]
        %v437 = vld [vmem:[%s3 + $0x48] sm:$0xff]
        %v438 = vld [vmem:[%s3 + $0x50] sm:$0xff]
        %v439 = vld [vmem:[%s3 + $0x58] sm:$0xff]
        %v440 = vld [vmem:[%s3 + $0x60] sm:$0xff]
        %v441 = vld [vmem:[%s3 + $0x68] sm:$0xff]
        %v442 = vld [vmem:[%s3 + $0x70] sm:$0xff]
        %v443 = vld [vmem:[%s3 + $0x78] sm:$0xff]
        %v444 = vld [vmem:[%s2] ss:$0 sm:$0xff]
        %445 = vmatprep.subr.mxu0 0.0
        %446 = vmatpush1.msra.mxu0 %v428
        %447 = vmatprep.subr.mxu0 0.0
        %448 = vmatpush1.msra.mxu0 %v429
        %449 = vmatprep.subr.mxu0 0.0
        %450 = vmatpush1.msra.mxu0 %v430
        %451 = vmatprep.subr.mxu0 0.0
        %452 = vmatpush1.msra.mxu0 %v431
        %453 = vmatprep.subr.mxu0 0.0
        %454 = vmatpush1.msra.mxu0 %v432
        %455 = vmatprep.subr.mxu0 0.0
        %456 = vmatpush1.msra.mxu0 %v433
        %457 = vmatprep.subr.mxu0 0.0
        %458 = vmatpush1.msra.mxu0 %v434
        %459 = vmatprep.subr.mxu0 0.0
        %460 = vmatpush1.msra.mxu0 %v435
        %461 = vmatprep.subr.mxu0 0.0
        %462 = vmatpush1.msra.mxu0 %v436
        %463 = vmatprep.subr.mxu0 0.0
        %464 = vmatpush1.msra.mxu0 %v437
        %465 = vmatprep.subr.mxu0 0.0
        %466 = vmatpush1.msra.mxu0 %v438
        %467 = vmatprep.subr.mxu0 0.0
        %468 = vmatpush1.msra.mxu0 %v439
        %469 = vmatprep.subr.mxu0 0.0
        %470 = vmatpush1.msra.mxu0 %v440
        %471 = vmatprep.subr.mxu0 0.0
        %472 = vmatpush1.msra.mxu0 %v441
        %473 = vmatprep.subr.mxu0 0.0
        %474 = vmatpush1.msra.mxu0 %v442
        %475 = vmatprep.subr.mxu0 0.0
        %476 = vmatpush1.msra.mxu0 %v443
        %477 = vmatprep.subr.mxu0 0.0
        %478 = vmatpush1.msra.mxu0 0.0
        %479 = vmatprep.subr.mxu0 0.0
        %480 = vmatpush1.msra.mxu0 0.0
        %481 = vmatprep.subr.mxu0 0.0
        %482 = vmatpush1.msra.mxu0 0.0
        %483 = vmatprep.subr.mxu0 0.0
        %484 = vmatpush1.msra.mxu0 0.0
        %485 = vmatprep.subr.mxu0 0.0
        %486 = vmatpush1.msra.mxu0 0.0
        %487 = vmatprep.subr.mxu0 0.0
        %488 = vmatpush1.msra.mxu0 0.0
        %489 = vmatprep.subr.mxu0 0.0
        %490 = vmatpush1.msra.mxu0 0.0
        %491 = vmatprep.subr.mxu0 0.0
        %492 = vmatpush1.msra.mxu0 0.0
        %493 = vmatprep.subr.mxu0 0.0
        %494 = vmatpush1.msra.mxu0 0.0
        %495 = vmatprep.subr.mxu0 0.0
        %496 = vmatpush1.msra.mxu0 0.0
        %497 = vmatprep.subr.mxu0 0.0
        %498 = vmatpush1.msra.mxu0 0.0
        %499 = vmatprep.subr.mxu0 0.0
        %500 = vmatpush1.msra.mxu0 0.0
        %501 = vmatprep.subr.mxu0 0.0
        %502 = vmatpush1.msra.mxu0 0.0
        %503 = vmatprep.subr.mxu0 0.0
        %504 = vmatpush1.msra.mxu0 0.0
        %505 = vmatprep.subr.mxu0 0.0
        %506 = vmatpush1.msra.mxu0 0.0
        %507 = vmatprep.subr.mxu0 0.0
        %508 = vmatpush1.msra.mxu0 0.0
        %509 = vmatprep.mubr.f32.mxu0 0.0
        %510 = vmatmul.mubr.f32.gmra.mrb[0].mxu0 %v426
        %v511 = vpop.f32.mrb[0].mxu0
        %v512 = vadd.f32 %v444, %v511
        %v513 = vpop.f32.mrb[0].mxu0
        %514 = vmatprep.mubr.f32.mxu0 0.0
        %515 = vmatmul.mubr.f32.gmra.mrb[0].mxu0 %v427
        %v516 = vpop.f32.mrb[0].mxu0
        %v517 = vadd.f32 %v444, %v516
        %v518 = vpop.f32.mrb[0].mxu0
        %519 = vdwg.mxu0
        %v520 = vpack.c.bf16 %v517, %v512
        %v521 = vld [vmem:[%s4] sm:$0xff]
        %v522 = vld [vmem:[%s4 + $0x8] sm:$0xff]
        %v523 = vld [vmem:[%s4 + $0x10] sm:$0xff]
        %v524 = vld [vmem:[%s4 + $0x18] sm:$0xff]
        %s525 = scalar_lea.vmem %s2, 1
        %v526 = vld [vmem:[%s525] ss:$8 sm:$0x3]
        %v528 = vlaneseq
        %v529 = vshrl.u32 %v528, 7
        %v530 = vsub.s32 0, %v529
        %v531 = vrot.slane %v526, %v530
        %v532 = vlaneseq
        %v533 = vshrl.u32 %v532, 7
        %v534 = vsub.s32 1, %v533
        %v535 = vrot.slane %v526, %v534
        %v542 = vunpack.c.l.b16 %v521
        %v543 = vunpack.c.h.b16 %v521
        %v544 = vunpack.c.l.b16 %v522
        %v545 = vunpack.c.h.b16 %v522
        %v546 = vunpack.c.l.b16 %v523
        %v547 = vunpack.c.h.b16 %v523
        %v548 = vunpack.c.l.b16 %v524
        %v549 = vunpack.c.h.b16 %v524
        %v550 = vpack.c.b16 %v544, %v542
        %v551 = vpack.c.b16 %v545, %v543
        %v552 = vpack.c.b16 %v548, %v546
        %v553 = vpack.c.b16 %v549, %v547
        %vm558 = vcmask 261120
        %v560 = vsel %vm558, %v520, 0
        %562 = vmatprep.subr.bf16.mxu0 %v551
        %563 = vmatpush1.bf16.msra.mxu0 %v550
        %564 = vmatprep.subr.bf16.mxu0 %v553
        %565 = vmatpush1.bf16.msra.mxu0 %v552
        %566 = vmatprep.subr.bf16.mxu0 0
        %567 = vmatpush1.bf16.msra.mxu0 0
        %568 = vmatprep.subr.bf16.mxu0 0
        %569 = vmatpush1.bf16.msra.mxu0 0
        %570 = vmatprep.subr.bf16.mxu0 0
        %571 = vmatpush1.bf16.msra.mxu0 0
        %572 = vmatprep.subr.bf16.mxu0 0
        %573 = vmatpush1.bf16.msra.mxu0 0
        %574 = vmatprep.subr.bf16.mxu0 0
        %575 = vmatpush1.bf16.msra.mxu0 0
        %576 = vmatprep.subr.bf16.mxu0 0
        %577 = vmatpush1.bf16.msra.mxu0 0
        %578 = vmatprep.subr.bf16.mxu0 0
        %579 = vmatpush1.bf16.msra.mxu0 0
        %580 = vmatprep.subr.bf16.mxu0 0
        %581 = vmatpush1.bf16.msra.mxu0 0
        %582 = vmatprep.subr.bf16.mxu0 0
        %583 = vmatpush1.bf16.msra.mxu0 0
        %584 = vmatprep.subr.bf16.mxu0 0
        %585 = vmatpush1.bf16.msra.mxu0 0
        %586 = vmatprep.subr.bf16.mxu0 0
        %587 = vmatpush1.bf16.msra.mxu0 0
        %588 = vmatprep.subr.bf16.mxu0 0
        %589 = vmatpush1.bf16.msra.mxu0 0
        %590 = vmatprep.subr.bf16.mxu0 0
        %591 = vmatpush1.bf16.msra.mxu0 0
        %592 = vmatprep.subr.bf16.mxu0 0
        %593 = vmatpush1.bf16.msra.mxu0 0
        %594 = vmatprep.mubr.bf16.mxu0 0
        %595 = vmatmul.mubr.bf16.gmra.mrb[0].mxu0 %v560
        %v596 = vpop.f32.mrb[0].mxu0
        %v597 = vadd.f32 %v531, %v596
        %v598 = vpop.f32.mrb[0].mxu0
        %v599 = vadd.f32 %v535, %v598
        %v600 = vpop.f32.mrb[0].mxu0
        %v601 = vadd.f32 %v531, %v600
        %v602 = vpop.f32.mrb[0].mxu0
        %v603 = vadd.f32 %v535, %v602
        %604 = vdwg.mxu0
        %v605 = vpack.c.bf16 %v601, %v597
        %v606 = vpack.c.bf16 %v603, %v599
        %608 = vrot.lane.b32.xlu0 %v605, 64
        %v609 = vpop.permute.xlu0 %608
        %v611 = vsel %vm558, %v605, 0
        %v614 = vsel %vm558, %v609, 0
        %616 = vmatprep.subr.bf16.mxu0 0
        %617 = vmatpush1.bf16.xpose.msra.mxu0 %v614
        %618 = vmatprep.subr.bf16.mxu0 0
        %619 = vmatpush1.bf16.xpose.msra.mxu0 0
        %620 = vmatprep.subr.bf16.mxu0 0
        %621 = vmatpush1.bf16.xpose.msra.mxu0 0
        %622 = vmatprep.subr.bf16.mxu0 0
        %623 = vmatpush1.bf16.xpose.msra.mxu0 0
        %624 = vmatprep.subr.bf16.mxu0 0
        %625 = vmatpush1.bf16.xpose.msra.mxu0 0
        %626 = vmatprep.subr.bf16.mxu0 0
        %627 = vmatpush1.bf16.xpose.msra.mxu0 0
        %628 = vmatprep.subr.bf16.mxu0 0
        %629 = vmatpush1.bf16.xpose.msra.mxu0 0
        %630 = vmatprep.subr.bf16.mxu0 0
        %631 = vmatpush1.bf16.xpose.msra.mxu0 0
        %632 = vmatprep.subr.bf16.mxu0 0
        %633 = vmatpush1.bf16.xpose.msra.mxu0 0
        %634 = vmatprep.subr.bf16.mxu0 0
        %635 = vmatpush1.bf16.xpose.msra.mxu0 0
        %636 = vmatprep.subr.bf16.mxu0 0
        %637 = vmatpush1.bf16.xpose.msra.mxu0 0
        %638 = vmatprep.subr.bf16.mxu0 0
        %639 = vmatpush1.bf16.xpose.msra.mxu0 0
        %640 = vmatprep.subr.bf16.mxu0 0
        %641 = vmatpush1.bf16.xpose.msra.mxu0 0
        %642 = vmatprep.subr.bf16.mxu0 0
        %643 = vmatpush1.bf16.xpose.msra.mxu0 0
        %644 = vmatprep.subr.bf16.mxu0 0
        %645 = vmatpush1.bf16.xpose.msra.mxu0 0
        %646 = vmatprep.subr.bf16.mxu0 0
        %647 = vmatpush1.bf16.xpose.msra.mxu0 0
        %648 = vmatprep.mubr.bf16.mxu0 0
        %649 = vmatmul.mubr.bf16.gmra.mrb[0].mxu0 %v611
        %v650 = vpop.f32.mrb[0].mxu0
        %v651 = vadd.f32 0.0, %v650
        %v652 = vpop.f32.mrb[0].mxu0
        %v653 = vpop.f32.mrb[0].mxu0
        %v654 = vadd.f32 0.0, %v653
        %v655 = vpop.f32.mrb[0].mxu0
        %656 = vdwg.mxu0
        %v657 = vmul.f32 %v651, 0.17677669
        %v658 = vmul.f32 %v654, 0.17677669
        %vm659 = vcmask 130048
        %v660 = vsel %vm659, %v657, -inf
        %661 = vmax.xlane.f32.xlu0 %v660
        %v662 = vpop.xlane.xlu0 %661
        %v663 = vsel %vm659, %v658, -inf
        %664 = vmax.xlane.f32.xlu0 %v663
        %v665 = vpop.xlane.xlu0 %664
        %v666 = vsub.f32 %v657, %v662
        %v667 = vsub.f32 %v658, %v665
        %v668 = vmul.f32 %v666, 1.442695
        %v669 = vpow.pop %v668
        %v670 = vmul.f32 %v667, 1.442695
        %v671 = vpow.pop %v670
        %v672 = vsel %vm659, %v669, 0.0
        %673 = vadd.xlane.f32.xlu0 %v672
        %v674 = vpop.xlane.xlu0 %673
        %v675 = vsel %vm659, %v671, 0.0
        %676 = vadd.xlane.f32.xlu0 %v675
        %v677 = vpop.xlane.xlu0 %676
        %v678 = vrcp.pop %v674
        %v679 = vrcp.pop %v677
        %v680 = vmul.f32 %v669, %v678
        %v681 = vmul.f32 %v671, %v679
        %v682 = vpack.c.bf16 %v681, %v680
        %v684 = vsel %vm659, %v682, 0
        %686 = vmatprep.subr.bf16.mxu0 0
        %687 = vmatpush1.bf16.msra.mxu0 %v606
        %688 = vmatprep.subr.bf16.mxu0 0
        %689 = vmatpush1.bf16.msra.mxu0 0
        %690 = vmatprep.subr.bf16.mxu0 0
        %691 = vmatpush1.bf16.msra.mxu0 0
        %692 = vmatprep.subr.bf16.mxu0 0
        %693 = vmatpush1.bf16.msra.mxu0 0
        %694 = vmatprep.subr.bf16.mxu0 0
        %695 = vmatpush1.bf16.msra.mxu0 0
        %696 = vmatprep.subr.bf16.mxu0 0
        %697 = vmatpush1.bf16.msra.mxu0 0
        %698 = vmatprep.subr.bf16.mxu0 0
        %699 = vmatpush1.bf16.msra.mxu0 0
        %700 = vmatprep.subr.bf16.mxu0 0
        %701 = vmatpush1.bf16.msra.mxu0 0
        %702 = vmatprep.subr.bf16.mxu0 0
        %703 = vmatpush1.bf16.msra.mxu0 0
        %704 = vmatprep.subr.bf16.mxu0 0
        %705 = vmatpush1.bf16.msra.mxu0 0
        %706 = vmatprep.subr.bf16.mxu0 0
        %707 = vmatpush1.bf16.msra.mxu0 0
        %708 = vmatprep.subr.bf16.mxu0 0
        %709 = vmatpush1.bf16.msra.mxu0 0
        %710 = vmatprep.subr.bf16.mxu0 0
        %711 = vmatpush1.bf16.msra.mxu0 0
        %712 = vmatprep.subr.bf16.mxu0 0
        %713 = vmatpush1.bf16.msra.mxu0 0
        %714 = vmatprep.subr.bf16.mxu0 0
        %715 = vmatpush1.bf16.msra.mxu0 0
        %716 = vmatprep.subr.bf16.mxu0 0
        %717 = vmatpush1.bf16.msra.mxu0 0
        %718 = vmatprep.mubr.bf16.mxu0 0
        %719 = vmatmul.mubr.bf16.gmra.mrb[0].mxu0 %v684
        %v720 = vpop.f32.mrb[0].mxu0
        %v721 = vadd.f32 0.0, %v720
        %v722 = vpop.f32.mrb[0].mxu0
        %v723 = vpop.f32.mrb[0].mxu0
        %v724 = vadd.f32 0.0, %v723
        %v725 = vpop.f32.mrb[0].mxu0
        %726 = vdwg.mxu0
        %727 = vrot.lane.b32.xlu0 %v605, 96
        %v728 = vpop.permute.xlu0 %727
        %729 = vrot.lane.b32.xlu0 %v605, 32
        %v730 = vpop.permute.xlu0 %729
        %v732 = vsel %vm558, %v728, 0
        %v735 = vsel %vm558, %v730, 0
        %737 = vmatprep.subr.bf16.mxu0 0
        %738 = vmatpush1.bf16.xpose.msra.mxu0 %v735
        %739 = vmatprep.subr.bf16.mxu0 0
        %740 = vmatpush1.bf16.xpose.msra.mxu0 0
        %741 = vmatprep.subr.bf16.mxu0 0
        %742 = vmatpush1.bf16.xpose.msra.mxu0 0
        %743 = vmatprep.subr.bf16.mxu0 0
        %744 = vmatpush1.bf16.xpose.msra.mxu0 0
        %745 = vmatprep.subr.bf16.mxu0 0
        %746 = vmatpush1.bf16.xpose.msra.mxu0 0
        %747 = vmatprep.subr.bf16.mxu0 0
        %748 = vmatpush1.bf16.xpose.msra.mxu0 0
        %749 = vmatprep.subr.bf16.mxu0 0
        %750 = vmatpush1.bf16.xpose.msra.mxu0 0
        %751 = vmatprep.subr.bf16.mxu0 0
        %752 = vmatpush1.bf16.xpose.msra.mxu0 0
        %753 = vmatprep.subr.bf16.mxu0 0
        %754 = vmatpush1.bf16.xpose.msra.mxu0 0
        %755 = vmatprep.subr.bf16.mxu0 0
        %756 = vmatpush1.bf16.xpose.msra.mxu0 0
        %757 = vmatprep.subr.bf16.mxu0 0
        %758 = vmatpush1.bf16.xpose.msra.mxu0 0
        %759 = vmatprep.subr.bf16.mxu0 0
        %760 = vmatpush1.bf16.xpose.msra.mxu0 0
        %761 = vmatprep.subr.bf16.mxu0 0
        %762 = vmatpush1.bf16.xpose.msra.mxu0 0
        %763 = vmatprep.subr.bf16.mxu0 0
        %764 = vmatpush1.bf16.xpose.msra.mxu0 0
        %765 = vmatprep.subr.bf16.mxu0 0
        %766 = vmatpush1.bf16.xpose.msra.mxu0 0
        %767 = vmatprep.subr.bf16.mxu0 0
        %768 = vmatpush1.bf16.xpose.msra.mxu0 0
        %769 = vmatprep.mubr.bf16.mxu0 0
        %770 = vmatmul.mubr.bf16.gmra.mrb[0].mxu0 %v732
        %v771 = vpop.f32.mrb[0].mxu0
        %v772 = vadd.f32 0.0, %v771
        %v773 = vpop.f32.mrb[0].mxu0
        %v774 = vpop.f32.mrb[0].mxu0
        %v775 = vadd.f32 0.0, %v774
        %v776 = vpop.f32.mrb[0].mxu0
        %777 = vdwg.mxu0
        %v778 = vmul.f32 %v772, 0.17677669
        %v779 = vmul.f32 %v775, 0.17677669
        %v780 = vsel %vm659, %v778, -inf
        %781 = vmax.xlane.f32.xlu0 %v780
        %v782 = vpop.xlane.xlu0 %781
        %v783 = vsel %vm659, %v779, -inf
        %784 = vmax.xlane.f32.xlu0 %v783
        %v785 = vpop.xlane.xlu0 %784
        %v786 = vsub.f32 %v778, %v782
        %v787 = vsub.f32 %v779, %v785
        %v788 = vmul.f32 %v786, 1.442695
        %v789 = vpow.pop %v788
        %v790 = vmul.f32 %v787, 1.442695
        %v791 = vpow.pop %v790
        %v792 = vsel %vm659, %v789, 0.0
        %793 = vadd.xlane.f32.xlu0 %v792
        %v794 = vpop.xlane.xlu0 %793
        %v795 = vsel %vm659, %v791, 0.0
        %796 = vadd.xlane.f32.xlu0 %v795
        %v797 = vpop.xlane.xlu0 %796
        %v798 = vrcp.pop %v794
        %v799 = vrcp.pop %v797
        %v800 = vmul.f32 %v789, %v798
        %v801 = vmul.f32 %v791, %v799
        %v802 = vpack.c.bf16 %v801, %v800
        %804 = vrot.lane.b32.xlu0 %v606, 96
        %v805 = vpop.permute.xlu0 %804
        %v808 = vsel %vm659, %v802, 0
        %810 = vmatprep.subr.bf16.mxu0 0
        %811 = vmatpush1.bf16.msra.mxu0 %v805
        %812 = vmatprep.subr.bf16.mxu0 0
        %813 = vmatpush1.bf16.msra.mxu0 0
        %814 = vmatprep.subr.bf16.mxu0 0
        %815 = vmatpush1.bf16.msra.mxu0 0
        %816 = vmatprep.subr.bf16.mxu0 0
        %817 = vmatpush1.bf16.msra.mxu0 0
        %818 = vmatprep.subr.bf16.mxu0 0
        %819 = vmatpush1.bf16.msra.mxu0 0
        %820 = vmatprep.subr.bf16.mxu0 0
        %821 = vmatpush1.bf16.msra.mxu0 0
        %822 = vmatprep.subr.bf16.mxu0 0
        %823 = vmatpush1.bf16.msra.mxu0 0
        %824 = vmatprep.subr.bf16.mxu0 0
        %825 = vmatpush1.bf16.msra.mxu0 0
        %826 = vmatprep.subr.bf16.mxu0 0
        %827 = vmatpush1.bf16.msra.mxu0 0
        %828 = vmatprep.subr.bf16.mxu0 0
        %829 = vmatpush1.bf16.msra.mxu0 0
        %830 = vmatprep.subr.bf16.mxu0 0
        %831 = vmatpush1.bf16.msra.mxu0 0
        %832 = vmatprep.subr.bf16.mxu0 0
        %833 = vmatpush1.bf16.msra.mxu0 0
        %834 = vmatprep.subr.bf16.mxu0 0
        %835 = vmatpush1.bf16.msra.mxu0 0
        %836 = vmatprep.subr.bf16.mxu0 0
        %837 = vmatpush1.bf16.msra.mxu0 0
        %838 = vmatprep.subr.bf16.mxu0 0
        %839 = vmatpush1.bf16.msra.mxu0 0
        %840 = vmatprep.subr.bf16.mxu0 0
        %841 = vmatpush1.bf16.msra.mxu0 0
        %842 = vmatprep.mubr.bf16.mxu0 0
        %843 = vmatmul.mubr.bf16.gmra.mrb[0].mxu0 %v808
        %v844 = vpop.f32.mrb[0].mxu0
        %v845 = vadd.f32 0.0, %v844
        %v846 = vpop.f32.mrb[0].mxu0
        %v847 = vpop.f32.mrb[0].mxu0
        %v848 = vadd.f32 0.0, %v847
        %v849 = vpop.f32.mrb[0].mxu0
        %850 = vdwg.mxu0
        %853 = vrot.lane.b32.xlu0 %v845, 32
        %v854 = vpop.permute.xlu0 %853
        %855 = vrot.lane.b32.xlu0 %v848, 32
        %v856 = vpop.permute.xlu0 %855
        %v859 = vsel %vm558, %v721, %v854
        %v860 = vsel %vm558, %v724, %v856
        %v861 = vpack.c.bf16 %v860, %v859
        %v862 = vld [vmem:[%s5] sm:$0xf]
        %v863 = vld [vmem:[%s5 + $0x4] sm:$0xf]
        %v864 = vld [vmem:[%s5 + $0x8] sm:$0xf]
        %v865 = vld [vmem:[%s5 + $0xc] sm:$0xf]
        %v866 = vld [vmem:[%s5 + $0x10] sm:$0xf]
        %v867 = vld [vmem:[%s5 + $0x14] sm:$0xf]
        %v868 = vld [vmem:[%s5 + $0x18] sm:$0xf]
        %v869 = vld [vmem:[%s5 + $0x1c] sm:$0xf]
        %v870 = vld [vmem:[%s2 + $0x2] ss:$0 sm:$0xff]
        %v879 = vunpack.c.l.b16 %v862
        %v880 = vunpack.c.l.b16 %v863
        %v881 = vunpack.c.l.b16 %v864
        %v882 = vunpack.c.l.b16 %v865
        %v883 = vunpack.c.l.b16 %v866
        %v884 = vunpack.c.l.b16 %v867
        %v885 = vunpack.c.l.b16 %v868
        %v886 = vunpack.c.l.b16 %v869
        %v887 = vpack.c.b16 %v880, %v879
        %v888 = vpack.c.b16 %v882, %v881
        %v889 = vpack.c.b16 %v884, %v883
        %v890 = vpack.c.b16 %v886, %v885
        %vm895 = vcmask 523264
        %v897 = vsel %vm895, %v861, 0
        %899 = vmatprep.subr.bf16.mxu0 0
        %900 = vmatpush1.bf16.msra.mxu0 %v887
        %901 = vmatprep.subr.bf16.mxu0 0
        %902 = vmatpush1.bf16.msra.mxu0 %v888
        %903 = vmatprep.subr.bf16.mxu0 0
        %904 = vmatpush1.bf16.msra.mxu0 %v889
        %905 = vmatprep.subr.bf16.mxu0 0
        %906 = vmatpush1.bf16.msra.mxu0 %v890
        %907 = vmatprep.subr.bf16.mxu0 0
        %908 = vmatpush1.bf16.msra.mxu0 0
        %909 = vmatprep.subr.bf16.mxu0 0
        %910 = vmatpush1.bf16.msra.mxu0 0
        %911 = vmatprep.subr.bf16.mxu0 0
        %912 = vmatpush1.bf16.msra.mxu0 0
        %913 = vmatprep.subr.bf16.mxu0 0
        %914 = vmatpush1.bf16.msra.mxu0 0
        %915 = vmatprep.subr.bf16.mxu0 0
        %916 = vmatpush1.bf16.msra.mxu0 0
        %917 = vmatprep.subr.bf16.mxu0 0
        %918 = vmatpush1.bf16.msra.mxu0 0
        %919 = vmatprep.subr.bf16.mxu0 0
        %920 = vmatpush1.bf16.msra.mxu0 0
        %921 = vmatprep.subr.bf16.mxu0 0
        %922 = vmatpush1.bf16.msra.mxu0 0
        %923 = vmatprep.subr.bf16.mxu0 0
        %924 = vmatpush1.bf16.msra.mxu0 0
        %925 = vmatprep.subr.bf16.mxu0 0
        %926 = vmatpush1.bf16.msra.mxu0 0
        %927 = vmatprep.subr.bf16.mxu0 0
        %928 = vmatpush1.bf16.msra.mxu0 0
        %929 = vmatprep.subr.bf16.mxu0 0
        %930 = vmatpush1.bf16.msra.mxu0 0
        %931 = vmatprep.mubr.bf16.mxu0 0
        %932 = vmatmul.mubr.bf16.gmra.mrb[0].mxu0 %v897
        %v933 = vpop.f32.mrb[0].mxu0
        %v934 = vadd.f32 %v870, %v933
        %v935 = vpop.f32.mrb[0].mxu0
        %v936 = vpop.f32.mrb[0].mxu0
        %v937 = vadd.f32 %v870, %v936
        %v938 = vpop.f32.mrb[0].mxu0
        %939 = vdwg.mxu0
        %v940 = vadd.f32 %v934, %v512
        %v941 = vadd.f32 %v937, %v517
        %v942 = vsel %vm558, %v940, 0.0
        %943 = vadd.xlane.f32.xlu0 %v942
        %v944 = vpop.xlane.xlu0 %943
        %v945 = vsel %vm558, %v941, 0.0
        %946 = vadd.xlane.f32.xlu0 %v945
        %v947 = vpop.xlane.xlu0 %946
        %v948 = vrcp.pop 32.0
        %v949 = vmul.f32 %v944, %v948
        %v950 = vmul.f32 %v947, %v948
        %v951 = vsub.f32 %v940, %v949
        %v952 = vsub.f32 %v941, %v950
        %v953 = vmul.f32 %v951, %v951
        %v954 = vmul.f32 %v952, %v952
        %v955 = vsel %vm558, %v953, 0.0
        %956 = vadd.xlane.f32.xlu0 %v955
        %v957 = vpop.xlane.xlu0 %956
        %v958 = vsel %vm558, %v954, 0.0
        %959 = vadd.xlane.f32.xlu0 %v958
        %v960 = vpop.xlane.xlu0 %959
        %v961 = vmul.f32 %v957, %v948
        %v962 = vmul.f32 %v960, %v948
        %v963 = vld [vmem:[%s2 + $0x3] ss:$0 sm:$0xff]
        %v964 = vadd.f32 %v961, 1e-12
        %v965 = vadd.f32 %v962, 1e-12
        %v966 = vrsqrt.pop %v964
        %v967 = vrsqrt.pop %v965
        %v968 = vmul.f32 %v951, %v966
        %v969 = vmul.f32 %v952, %v967
        %v970 = vmul.f32 %v963, %v968
        %v971 = vmul.f32 %v963, %v969
        %v972 = vld [vmem:[%s2 + $0x4] ss:$0 sm:$0xff]
        %v973 = vadd.f32 %v970, %v972
        %v974 = vadd.f32 %v971, %v972
        %v976 = vrot.slane %v973, 1
        %977 = vrot.lane.b32.xlu0 %v976, 32
        %v978 = vpop.permute.xlu0 %977
        %v980 = vrot.slane %v973, 2
        %981 = vrot.lane.b32.xlu0 %v980, 64
        %v982 = vpop.permute.xlu0 %981
        %v984 = vrot.slane %v973, 3
        %985 = vrot.lane.b32.xlu0 %v984, 96
        %v986 = vpop.permute.xlu0 %985
        %v988 = vrot.slane %v973, 4
        %v990 = vrot.slane %v973, 5
        %991 = vrot.lane.b32.xlu0 %v990, 32
        %v992 = vpop.permute.xlu0 %991
        %v994 = vrot.slane %v973, 6
        %995 = vrot.lane.b32.xlu0 %v994, 64
        %v996 = vpop.permute.xlu0 %995
        %v998 = vrot.slane %v973, 7
        %999 = vrot.lane.b32.xlu0 %v998, 96
        %v1000 = vpop.permute.xlu0 %999
        %v1003 = vrot.slane %v974, 1
        %1004 = vrot.lane.b32.xlu0 %v1003, 32
        %v1005 = vpop.permute.xlu0 %1004
        %v1007 = vrot.slane %v974, 2
        %1008 = vrot.lane.b32.xlu0 %v1007, 64
        %v1009 = vpop.permute.xlu0 %1008
        %v1011 = vrot.slane %v974, 3
        %1012 = vrot.lane.b32.xlu0 %v1011, 96
        %v1013 = vpop.permute.xlu0 %1012
        %v1015 = vrot.slane %v974, 4
        %v1017 = vrot.slane %v974, 5
        %1018 = vrot.lane.b32.xlu0 %v1017, 32
        %v1019 = vpop.permute.xlu0 %1018
        %v1021 = vrot.slane %v974, 6
        %1022 = vrot.lane.b32.xlu0 %v1021, 64
        %v1023 = vpop.permute.xlu0 %1022
        %v1025 = vrot.slane %v974, 7
        %1026 = vrot.lane.b32.xlu0 %v1025, 96
        %v1027 = vpop.permute.xlu0 %1026
        %v1029 = vsel %vm558, %v973, %v978
        %v1030 = vsel %vm895, %v1029, %v982
        %vm1031 = vcmask 785408
        %v1032 = vsel %vm1031, %v1030, %v986
        %v1033 = vsel %vm558, %v988, %v992
        %v1034 = vsel %vm895, %v1033, %v996
        %v1035 = vsel %vm1031, %v1034, %v1000
        %v1036 = vsel %vm558, %v974, %v1005
        %v1037 = vsel %vm895, %v1036, %v1009
        %v1038 = vsel %vm1031, %v1037, %v1013
        %v1039 = vsel %vm558, %v1015, %v1019
        %v1040 = vsel %vm895, %v1039, %v1023
        %v1041 = vsel %vm1031, %v1040, %v1027
        %v1042 = vpack.c.bf16 %v1032, %v1032
        %v1043 = vpack.c.bf16 %v1035, %v1035
        %v1044 = vpack.c.bf16 %v1038, %v1038
        %v1045 = vpack.c.bf16 %v1041, %v1041
        %v1046 = vld [vmem:[%s6] sm:$0xf]
        %v1047 = vld [vmem:[%s6 + $0x4] sm:$0xf]
        %v1048 = vld [vmem:[%s6 + $0x8] sm:$0xf]
        %v1049 = vld [vmem:[%s6 + $0xc] sm:$0xf]
        %v1050 = vld [vmem:[%s6 + $0x10] sm:$0xf]
        %v1051 = vld [vmem:[%s6 + $0x14] sm:$0xf]
        %v1052 = vld [vmem:[%s6 + $0x18] sm:$0xf]
        %v1053 = vld [vmem:[%s6 + $0x1c] sm:$0xf]
        %v1054 = vld [vmem:[%s6 + $0x20] sm:$0xf]
        %v1055 = vld [vmem:[%s6 + $0x24] sm:$0xf]
        %v1056 = vld [vmem:[%s6 + $0x28] sm:$0xf]
        %v1057 = vld [vmem:[%s6 + $0x2c] sm:$0xf]
        %v1058 = vld [vmem:[%s6 + $0x30] sm:$0xf]
        %v1059 = vld [vmem:[%s6 + $0x34] sm:$0xf]
        %v1060 = vld [vmem:[%s6 + $0x38] sm:$0xf]
        %v1061 = vld [vmem:[%s6 + $0x3c] sm:$0xf]
        %v1062 = vld [vmem:[%s6 + $0x40] sm:$0xf]
        %v1063 = vld [vmem:[%s6 + $0x44] sm:$0xf]
        %v1064 = vld [vmem:[%s6 + $0x48] sm:$0xf]
        %v1065 = vld [vmem:[%s6 + $0x4c] sm:$0xf]
        %v1066 = vld [vmem:[%s6 + $0x50] sm:$0xf]
        %v1067 = vld [vmem:[%s6 + $0x54] sm:$0xf]
        %v1068 = vld [vmem:[%s6 + $0x58] sm:$0xf]
        %v1069 = vld [vmem:[%s6 + $0x5c] sm:$0xf]
        %v1070 = vld [vmem:[%s6 + $0x60] sm:$0xf]
        %v1071 = vld [vmem:[%s6 + $0x64] sm:$0xf]
        %v1072 = vld [vmem:[%s6 + $0x68] sm:$0xf]
        %v1073 = vld [vmem:[%s6 + $0x6c] sm:$0xf]
        %v1074 = vld [vmem:[%s6 + $0x70] sm:$0xf]
        %v1075 = vld [vmem:[%s6 + $0x74] sm:$0xf]
        %v1076 = vld [vmem:[%s6 + $0x78] sm:$0xf]
        %v1077 = vld [vmem:[%s6 + $0x7c] sm:$0xf]
        %v1078 = vld [vmem:[%s6 + $0x80] sm:$0xf]
        %v1079 = vld [vmem:[%s6 + $0x84] sm:$0xf]
        %v1080 = vld [vmem:[%s6 + $0x88] sm:$0xf]
        %v1081 = vld [vmem:[%s6 + $0x8c] sm:$0xf]
        %v1082 = vld [vmem:[%s6 + $0x90] sm:$0xf]
        %v1083 = vld [vmem:[%s6 + $0x94] sm:$0xf]
        %v1084 = vld [vmem:[%s6 + $0x98] sm:$0xf]
        %v1085 = vld [vmem:[%s6 + $0x9c] sm:$0xf]
        %v1086 = vld [vmem:[%s6 + $0xa0] sm:$0xf]
        %v1087 = vld [vmem:[%s6 + $0xa4] sm:$0xf]
        %v1088 = vld [vmem:[%s6 + $0xa8] sm:$0xf]
        %v1089 = vld [vmem:[%s6 + $0xac] sm:$0xf]
        %v1090 = vld [vmem:[%s6 + $0xb0] sm:$0xf]
        %v1091 = vld [vmem:[%s6 + $0xb4] sm:$0xf]
        %v1092 = vld [vmem:[%s6 + $0xb8] sm:$0xf]
        %v1093 = vld [vmem:[%s6 + $0xbc] sm:$0xf]
        %v1094 = vld [vmem:[%s6 + $0xc0] sm:$0xf]
        %v1095 = vld [vmem:[%s6 + $0xc4] sm:$0xf]
        %v1096 = vld [vmem:[%s6 + $0xc8] sm:$0xf]
        %v1097 = vld [vmem:[%s6 + $0xcc] sm:$0xf]
        %v1098 = vld [vmem:[%s6 + $0xd0] sm:$0xf]
        %v1099 = vld [vmem:[%s6 + $0xd4] sm:$0xf]
        %v1100 = vld [vmem:[%s6 + $0xd8] sm:$0xf]
        %v1101 = vld [vmem:[%s6 + $0xdc] sm:$0xf]
        %v1102 = vld [vmem:[%s6 + $0xe0] sm:$0xf]
        %v1103 = vld [vmem:[%s6 + $0xe4] sm:$0xf]
        %v1104 = vld [vmem:[%s6 + $0xe8] sm:$0xf]
        %v1105 = vld [vmem:[%s6 + $0xec] sm:$0xf]
        %v1106 = vld [vmem:[%s6 + $0xf0] sm:$0xf]
        %v1107 = vld [vmem:[%s6 + $0xf4] sm:$0xf]
        %v1108 = vld [vmem:[%s6 + $0xf8] sm:$0xf]
        %v1109 = vld [vmem:[%s6 + $0xfc] sm:$0xf]
        %v1110 = vld [vmem:[%s2 + $0x5] ss:$0 sm:$0xff]
        %v1175 = vunpack.c.l.b16 %v1046
        %v1176 = vunpack.c.l.b16 %v1047
        %v1177 = vunpack.c.l.b16 %v1048
        %v1178 = vunpack.c.l.b16 %v1049
        %v1179 = vunpack.c.l.b16 %v1050
        %v1180 = vunpack.c.l.b16 %v1051
        %v1181 = vunpack.c.l.b16 %v1052
        %v1182 = vunpack.c.l.b16 %v1053
        %v1183 = vunpack.c.l.b16 %v1054
        %v1184 = vunpack.c.l.b16 %v1055
        %v1185 = vunpack.c.l.b16 %v1056
        %v1186 = vunpack.c.l.b16 %v1057
        %v1187 = vunpack.c.l.b16 %v1058
        %v1188 = vunpack.c.l.b16 %v1059
        %v1189 = vunpack.c.l.b16 %v1060
        %v1190 = vunpack.c.l.b16 %v1061
        %v1191 = vunpack.c.l.b16 %v1062
        %v1192 = vunpack.c.l.b16 %v1063
        %v1193 = vunpack.c.l.b16 %v1064
        %v1194 = vunpack.c.l.b16 %v1065
        %v1195 = vunpack.c.l.b16 %v1066
        %v1196 = vunpack.c.l.b16 %v1067
        %v1197 = vunpack.c.l.b16 %v1068
        %v1198 = vunpack.c.l.b16 %v1069
        %v1199 = vunpack.c.l.b16 %v1070
        %v1200 = vunpack.c.l.b16 %v1071
        %v1201 = vunpack.c.l.b16 %v1072
        %v1202 = vunpack.c.l.b16 %v1073
        %v1203 = vunpack.c.l.b16 %v1074
        %v1204 = vunpack.c.l.b16 %v1075
        %v1205 = vunpack.c.l.b16 %v1076
        %v1206 = vunpack.c.l.b16 %v1077
        %v1207 = vunpack.c.l.b16 %v1078
        %v1208 = vunpack.c.l.b16 %v1079
        %v1209 = vunpack.c.l.b16 %v1080
        %v1210 = vunpack.c.l.b16 %v1081
        %v1211 = vunpack.c.l.b16 %v1082
        %v1212 = vunpack.c.l.b16 %v1083
        %v1213 = vunpack.c.l.b16 %v1084
        %v1214 = vunpack.c.l.b16 %v1085
        %v1215 = vunpack.c.l.b16 %v1086
        %v1216 = vunpack.c.l.b16 %v1087
        %v1217 = vunpack.c.l.b16 %v1088
        %v1218 = vunpack.c.l.b16 %v1089
        %v1219 = vunpack.c.l.b16 %v1090
        %v1220 = vunpack.c.l.b16 %v1091
        %v1221 = vunpack.c.l.b16 %v1092
        %v1222 = vunpack.c.l.b16 %v1093
        %v1223 = vunpack.c.l.b16 %v1094
        %v1224 = vunpack.c.l.b16 %v1095
        %v1225 = vunpack.c.l.b16 %v1096
        %v1226 = vunpack.c.l.b16 %v1097
        %v1227 = vunpack.c.l.b16 %v1098
        %v1228 = vunpack.c.l.b16 %v1099
        %v1229 = vunpack.c.l.b16 %v1100
        %v1230 = vunpack.c.l.b16 %v1101
        %v1231 = vunpack.c.l.b16 %v1102
        %v1232 = vunpack.c.l.b16 %v1103
        %v1233 = vunpack.c.l.b16 %v1104
        %v1234 = vunpack.c.l.b16 %v1105
        %v1235 = vunpack.c.l.b16 %v1106
        %v1236 = vunpack.c.l.b16 %v1107
        %v1237 = vunpack.c.l.b16 %v1108
        %v1238 = vunpack.c.l.b16 %v1109
        %v1239 = vpack.c.b16 %v1176, %v1175
        %v1240 = vpack.c.b16 %v1178, %v1177
        %v1241 = vpack.c.b16 %v1180, %v1179
        %v1242 = vpack.c.b16 %v1182, %v1181
        %v1243 = vpack.c.b16 %v1184, %v1183
        %v1244 = vpack.c.b16 %v1186, %v1185
        %v1245 = vpack.c.b16 %v1188, %v1187
        %v1246 = vpack.c.b16 %v1190, %v1189
        %v1247 = vpack.c.b16 %v1192, %v1191
        %v1248 = vpack.c.b16 %v1194, %v1193
        %v1249 = vpack.c.b16 %v1196, %v1195
        %v1250 = vpack.c.b16 %v1198, %v1197
        %v1251 = vpack.c.b16 %v1200, %v1199
        %v1252 = vpack.c.b16 %v1202, %v1201
        %v1253 = vpack.c.b16 %v1204, %v1203
        %v1254 = vpack.c.b16 %v1206, %v1205
        %v1255 = vpack.c.b16 %v1208, %v1207
        %v1256 = vpack.c.b16 %v1210, %v1209
        %v1257 = vpack.c.b16 %v1212, %v1211
        %v1258 = vpack.c.b16 %v1214, %v1213
        %v1259 = vpack.c.b16 %v1216, %v1215
        %v1260 = vpack.c.b16 %v1218, %v1217
        %v1261 = vpack.c.b16 %v1220, %v1219
        %v1262 = vpack.c.b16 %v1222, %v1221
        %v1263 = vpack.c.b16 %v1224, %v1223
        %v1264 = vpack.c.b16 %v1226, %v1225
        %v1265 = vpack.c.b16 %v1228, %v1227
        %v1266 = vpack.c.b16 %v1230, %v1229
        %v1267 = vpack.c.b16 %v1232, %v1231
        %v1268 = vpack.c.b16 %v1234, %v1233
        %v1269 = vpack.c.b16 %v1236, %v1235
        %v1270 = vpack.c.b16 %v1238, %v1237
        %1303 = vmatprep.subr.bf16.mxu0 0
        %1304 = vmatpush1.bf16.msra.mxu0 %v1239
        %1305 = vmatprep.subr.bf16.mxu0 0
        %1306 = vmatpush1.bf16.msra.mxu0 %v1240
        %1307 = vmatprep.subr.bf16.mxu0 0
        %1308 = vmatpush1.bf16.msra.mxu0 %v1241
        %1309 = vmatprep.subr.bf16.mxu0 0
        %1310 = vmatpush1.bf16.msra.mxu0 %v1242
        %1311 = vmatprep.subr.bf16.mxu0 0
        %1312 = vmatpush1.bf16.msra.mxu0 %v1243
        %1313 = vmatprep.subr.bf16.mxu0 0
        %1314 = vmatpush1.bf16.msra.mxu0 %v1244
        %1315 = vmatprep.subr.bf16.mxu0 0
        %1316 = vmatpush1.bf16.msra.mxu0 %v1245
        %1317 = vmatprep.subr.bf16.mxu0 0
        %1318 = vmatpush1.bf16.msra.mxu0 %v1246
        %1319 = vmatprep.subr.bf16.mxu0 0
        %1320 = vmatpush1.bf16.msra.mxu0 %v1247
        %1321 = vmatprep.subr.bf16.mxu0 0
        %1322 = vmatpush1.bf16.msra.mxu0 %v1248
        %1323 = vmatprep.subr.bf16.mxu0 0
        %1324 = vmatpush1.bf16.msra.mxu0 %v1249
        %1325 = vmatprep.subr.bf16.mxu0 0
        %1326 = vmatpush1.bf16.msra.mxu0 %v1250
        %1327 = vmatprep.subr.bf16.mxu0 0
        %1328 = vmatpush1.bf16.msra.mxu0 %v1251
        %1329 = vmatprep.subr.bf16.mxu0 0
        %1330 = vmatpush1.bf16.msra.mxu0 %v1252
        %1331 = vmatprep.subr.bf16.mxu0 0
        %1332 = vmatpush1.bf16.msra.mxu0 %v1253
        %1333 = vmatprep.subr.bf16.mxu0 0
        %1334 = vmatpush1.bf16.msra.mxu0 %v1254
        %1335 = vmatprep.mubr.bf16.mxu0 %v1043
        %1336 = vmatmul.mubr.bf16.gmra.mrb[0].mxu0 %v1042
        %v1337 = vpop.f32.mrb[0].mxu0
        %v1338 = vadd.f32 %v1110, %v1337
        %v1339 = vpop.f32.mrb[0].mxu0
        %v1340 = vpop.f32.mrb[0].mxu0
        %v1341 = vpop.f32.mrb[0].mxu0
        %1342 = vdwg.mxu0
        %1343 = vmatprep.subr.bf16.mxu0 0
        %1344 = vmatpush1.bf16.msra.mxu0 %v1255
        %1345 = vmatprep.subr.bf16.mxu0 0
        %1346 = vmatpush1.bf16.msra.mxu0 %v1256
        %1347 = vmatprep.subr.bf16.mxu0 0
        %1348 = vmatpush1.bf16.msra.mxu0 %v1257
        %1349 = vmatprep.subr.bf16.mxu0 0
        %1350 = vmatpush1.bf16.msra.mxu0 %v1258
        %1351 = vmatprep.subr.bf16.mxu0 0
        %1352 = vmatpush1.bf16.msra.mxu0 %v1259
        %1353 = vmatprep.subr.bf16.mxu0 0
        %1354 = vmatpush1.bf16.msra.mxu0 %v1260
        %1355 = vmatprep.subr.bf16.mxu0 0
        %1356 = vmatpush1.bf16.msra.mxu0 %v1261
        %1357 = vmatprep.subr.bf16.mxu0 0
        %1358 = vmatpush1.bf16.msra.mxu0 %v1262
        %1359 = vmatprep.subr.bf16.mxu0 0
        %1360 = vmatpush1.bf16.msra.mxu0 %v1263
        %1361 = vmatprep.subr.bf16.mxu0 0
        %1362 = vmatpush1.bf16.msra.mxu0 %v1264
        %1363 = vmatprep.subr.bf16.mxu0 0
        %1364 = vmatpush1.bf16.msra.mxu0 %v1265
        %1365 = vmatprep.subr.bf16.mxu0 0
        %1366 = vmatpush1.bf16.msra.mxu0 %v1266
        %1367 = vmatprep.subr.bf16.mxu0 0
        %1368 = vmatpush1.bf16.msra.mxu0 %v1267
        %1369 = vmatprep.subr.bf16.mxu0 0
        %1370 = vmatpush1.bf16.msra.mxu0 %v1268
        %1371 = vmatprep.subr.bf16.mxu0 0
        %1372 = vmatpush1.bf16.msra.mxu0 %v1269
        %1373 = vmatprep.subr.bf16.mxu0 0
        %1374 = vmatpush1.bf16.msra.mxu0 %v1270
        %1375 = vmatprep.mubr.bf16.mxu0 %v1045
        %1376 = vmatmul.mubr.bf16.gmra.mrb[0].mxu0 %v1044
        %v1377 = vpop.f32.mrb[0].mxu0
        %v1378 = vadd.f32 %v1338, %v1377
        %v1379 = vpop.f32.mrb[0].mxu0
        %v1380 = vpop.f32.mrb[0].mxu0
        %v1381 = vpop.f32.mrb[0].mxu0
        %1382 = vdwg.mxu0
        %v1383 = vld [vmem:[%s2 + $0x6] ss:$0 sm:$0xff]
        %v1384 = vmul.f32 %v1378, %v1383
        %v1385 = vld [vmem:[%s2 + $0x7] ss:$0 sm:$0xff]
        %v1386 = vadd.f32 %v1384, %v1385
        %v1387 = vmax.f32 %v1386, 0.0
        %v1388 = vld [vmem:[%s7] sm:$0xff]
        %v1389 = vld [vmem:[%s7 + $0x8] sm:$0xff]
        %v1390 = vld [vmem:[%s7 + $0x10] sm:$0xff]
        %v1391 = vld [vmem:[%s7 + $0x18] sm:$0xff]
        %v1392 = vld [vmem:[%s2 + $0x10] ss:$0 sm:$0xff]
        %v1394 = vsel %vm558, %v1387, 0
        %1396 = vmatprep.subr.mxu0 0.0
        %1397 = vmatpush1.msra.mxu0 %v1388
        %1398 = vmatprep.subr.mxu0 0.0
        %1399 = vmatpush1.msra.mxu0 %v1389
        %1400 = vmatprep.subr.mxu0 0.0
        %1401 = vmatpush1.msra.mxu0 %v1390
        %1402 = vmatprep.subr.mxu0 0.0
        %1403 = vmatpush1.msra.mxu0 %v1391
        %1404 = vmatprep.subr.mxu0 0.0
        %1405 = vmatpush1.msra.mxu0 0.0
        %1406 = vmatprep.subr.mxu0 0.0
        %1407 = vmatpush1.msra.mxu0 0.0
        %1408 = vmatprep.subr.mxu0 0.0
        %1409 = vmatpush1.msra.mxu0 0.0
        %1410 = vmatprep.subr.mxu0 0.0
        %1411 = vmatpush1.msra.mxu0 0.0
        %1412 = vmatprep.subr.mxu0 0.0
        %1413 = vmatpush1.msra.mxu0 0.0
        %1414 = vmatprep.subr.mxu0 0.0
        %1415 = vmatpush1.msra.mxu0 0.0
        %1416 = vmatprep.subr.mxu0 0.0
        %1417 = vmatpush1.msra.mxu0 0.0
        %1418 = vmatprep.subr.mxu0 0.0
        %1419 = vmatpush1.msra.mxu0 0.0
        %1420 = vmatprep.subr.mxu0 0.0
        %1421 = vmatpush1.msra.mxu0 0.0
        %1422 = vmatprep.subr.mxu0 0.0
        %1423 = vmatpush1.msra.mxu0 0.0
        %1424 = vmatprep.subr.mxu0 0.0
        %1425 = vmatpush1.msra.mxu0 0.0
        %1426 = vmatprep.subr.mxu0 0.0
        %1427 = vmatpush1.msra.mxu0 0.0
        %1428 = vmatprep.subr.mxu0 0.0
        %1429 = vmatpush1.msra.mxu0 0.0
        %1430 = vmatprep.subr.mxu0 0.0
        %1431 = vmatpush1.msra.mxu0 0.0
        %1432 = vmatprep.subr.mxu0 0.0
        %1433 = vmatpush1.msra.mxu0 0.0
        %1434 = vmatprep.subr.mxu0 0.0
        %1435 = vmatpush1.msra.mxu0 0.0
        %1436 = vmatprep.subr.mxu0 0.0
        %1437 = vmatpush1.msra.mxu0 0.0
        %1438 = vmatprep.subr.mxu0 0.0
        %1439 = vmatpush1.msra.mxu0 0.0
        %1440 = vmatprep.subr.mxu0 0.0
        %1441 = vmatpush1.msra.mxu0 0.0
        %1442 = vmatprep.subr.mxu0 0.0
        %1443 = vmatpush1.msra.mxu0 0.0
        %1444 = vmatprep.subr.mxu0 0.0
        %1445 = vmatpush1.msra.mxu0 0.0
        %1446 = vmatprep.subr.mxu0 0.0
        %1447 = vmatpush1.msra.mxu0 0.0
        %1448 = vmatprep.subr.mxu0 0.0
        %1449 = vmatpush1.msra.mxu0 0.0
        %1450 = vmatprep.subr.mxu0 0.0
        %1451 = vmatpush1.msra.mxu0 0.0
        %1452 = vmatprep.subr.mxu0 0.0
        %1453 = vmatpush1.msra.mxu0 0.0
        %1454 = vmatprep.subr.mxu0 0.0
        %1455 = vmatpush1.msra.mxu0 0.0
        %1456 = vmatprep.subr.mxu0 0.0
        %1457 = vmatpush1.msra.mxu0 0.0
        %1458 = vmatprep.subr.mxu0 0.0
        %1459 = vmatpush1.msra.mxu0 0.0
        %1460 = vmatprep.mubr.f32.mxu0 0.0
        %1461 = vmatmul.mubr.f32.gmra.mrb[0].mxu0 %v1394
        %v1462 = vpop.f32.mrb[0].mxu0
        %v1463 = vadd.f32 %v1392, %v1462
        %v1464 = vpop.f32.mrb[0].mxu0
        %1465 = vdwg.mxu0
        %v1466 = vld [vmem:[%s424] sm:$0x1]
        %v1467 = vld [vmem:[%s8] sm:$0xff]
        %v1468 = vld [vmem:[%s8 + $0x8] sm:$0xff]
        %v1469 = vld [vmem:[%s8 + $0x10] sm:$0xff]
        %v1470 = vld [vmem:[%s8 + $0x18] sm:$0xff]
        %v1471 = vld [vmem:[%s8 + $0x20] sm:$0xff]
        %v1472 = vld [vmem:[%s8 + $0x28] sm:$0xff]
        %v1473 = vld [vmem:[%s8 + $0x30] sm:$0xff]
        %v1474 = vld [vmem:[%s8 + $0x38] sm:$0xff]
        %v1475 = vld [vmem:[%s2 + $0x11] ss:$0 sm:$0xff]
        %v1477 = vsel %vm895, %v1466, 0
        %1479 = vmatprep.subr.mxu0 0.0
        %1480 = vmatpush1.msra.mxu0 %v1467
        %1481 = vmatprep.subr.mxu0 0.0
        %1482 = vmatpush1.msra.mxu0 %v1468
        %1483 = vmatprep.subr.mxu0 0.0
        %1484 = vmatpush1.msra.mxu0 %v1469
        %1485 = vmatprep.subr.mxu0 0.0
        %1486 = vmatpush1.msra.mxu0 %v1470
        %1487 = vmatprep.subr.mxu0 0.0
        %1488 = vmatpush1.msra.mxu0 %v1471
        %1489 = vmatprep.subr.mxu0 0.0
        %1490 = vmatpush1.msra.mxu0 %v1472
        %1491 = vmatprep.subr.mxu0 0.0
        %1492 = vmatpush1.msra.mxu0 %v1473
        %1493 = vmatprep.subr.mxu0 0.0
        %1494 = vmatpush1.msra.mxu0 %v1474
        %1495 = vmatprep.subr.mxu0 0.0
        %1496 = vmatpush1.msra.mxu0 0.0
        %1497 = vmatprep.subr.mxu0 0.0
        %1498 = vmatpush1.msra.mxu0 0.0
        %1499 = vmatprep.subr.mxu0 0.0
        %1500 = vmatpush1.msra.mxu0 0.0
        %1501 = vmatprep.subr.mxu0 0.0
        %1502 = vmatpush1.msra.mxu0 0.0
        %1503 = vmatprep.subr.mxu0 0.0
        %1504 = vmatpush1.msra.mxu0 0.0
        %1505 = vmatprep.subr.mxu0 0.0
        %1506 = vmatpush1.msra.mxu0 0.0
        %1507 = vmatprep.subr.mxu0 0.0
        %1508 = vmatpush1.msra.mxu0 0.0
        %1509 = vmatprep.subr.mxu0 0.0
        %1510 = vmatpush1.msra.mxu0 0.0
        %1511 = vmatprep.subr.mxu0 0.0
        %1512 = vmatpush1.msra.mxu0 0.0
        %1513 = vmatprep.subr.mxu0 0.0
        %1514 = vmatpush1.msra.mxu0 0.0
        %1515 = vmatprep.subr.mxu0 0.0
        %1516 = vmatpush1.msra.mxu0 0.0
        %1517 = vmatprep.subr.mxu0 0.0
        %1518 = vmatpush1.msra.mxu0 0.0
        %1519 = vmatprep.subr.mxu0 0.0
        %1520 = vmatpush1.msra.mxu0 0.0
        %1521 = vmatprep.subr.mxu0 0.0
        %1522 = vmatpush1.msra.mxu0 0.0
        %1523 = vmatprep.subr.mxu0 0.0
        %1524 = vmatpush1.msra.mxu0 0.0
        %1525 = vmatprep.subr.mxu0 0.0
        %1526 = vmatpush1.msra.mxu0 0.0
        %1527 = vmatprep.subr.mxu0 0.0
        %1528 = vmatpush1.msra.mxu0 0.0
        %1529 = vmatprep.subr.mxu0 0.0
        %1530 = vmatpush1.msra.mxu0 0.0
        %1531 = vmatprep.subr.mxu0 0.0
        %1532 = vmatpush1.msra.mxu0 0.0
        %1533 = vmatprep.subr.mxu0 0.0
        %1534 = vmatpush1.msra.mxu0 0.0
        %1535 = vmatprep.subr.mxu0 0.0
        %1536 = vmatpush1.msra.mxu0 0.0
        %1537 = vmatprep.subr.mxu0 0.0
        %1538 = vmatpush1.msra.mxu0 0.0
        %1539 = vmatprep.subr.mxu0 0.0
        %1540 = vmatpush1.msra.mxu0 0.0
        %1541 = vmatprep.subr.mxu0 0.0
        %1542 = vmatpush1.msra.mxu0 0.0
        %1543 = vmatprep.mubr.f32.mxu0 0.0
        %1544 = vmatmul.mubr.f32.gmra.mrb[0].mxu0 %v1477
        %v1545 = vpop.f32.mrb[0].mxu0
        %v1546 = vadd.f32 %v1475, %v1545
        %v1547 = vpop.f32.mrb[0].mxu0
        %1548 = vdwg.mxu0
        %v1549 = vld [vmem:[%s2 + $0x12] ss:$0 sm:$0xff]
        %v1550 = vmul.f32 %v1546, %v1549
        %v1551 = vld [vmem:[%s2 + $0x13] ss:$0 sm:$0xff]
        %v1552 = vadd.f32 %v1550, %v1551
        %v1553 = vmax.f32 %v1552, 0.0
        %v1554 = vld [vmem:[%s9] sm:$0xff]
        %v1555 = vld [vmem:[%s9 + $0x8] sm:$0xff]
        %v1556 = vld [vmem:[%s9 + $0x10] sm:$0xff]
        %v1557 = vld [vmem:[%s9 + $0x18] sm:$0xff]
        %v1558 = vld [vmem:[%s2 + $0x14] ss:$0 sm:$0xff]
        %v1560 = vsel %vm558, %v1553, 0
        %1562 = vmatprep.subr.mxu0 0.0
        %1563 = vmatpush1.msra.mxu0 %v1554
        %1564 = vmatprep.subr.mxu0 0.0
        %1565 = vmatpush1.msra.mxu0 %v1555
        %1566 = vmatprep.subr.mxu0 0.0
        %1567 = vmatpush1.msra.mxu0 %v1556
        %1568 = vmatprep.subr.mxu0 0.0
        %1569 = vmatpush1.msra.mxu0 %v1557
        %1570 = vmatprep.subr.mxu0 0.0
        %1571 = vmatpush1.msra.mxu0 0.0
        %1572 = vmatprep.subr.mxu0 0.0
        %1573 = vmatpush1.msra.mxu0 0.0
        %1574 = vmatprep.subr.mxu0 0.0
        %1575 = vmatpush1.msra.mxu0 0.0
        %1576 = vmatprep.subr.mxu0 0.0
        %1577 = vmatpush1.msra.mxu0 0.0
        %1578 = vmatprep.subr.mxu0 0.0
        %1579 = vmatpush1.msra.mxu0 0.0
        %1580 = vmatprep.subr.mxu0 0.0
        %1581 = vmatpush1.msra.mxu0 0.0
        %1582 = vmatprep.subr.mxu0 0.0
        %1583 = vmatpush1.msra.mxu0 0.0
        %1584 = vmatprep.subr.mxu0 0.0
        %1585 = vmatpush1.msra.mxu0 0.0
        %1586 = vmatprep.subr.mxu0 0.0
        %1587 = vmatpush1.msra.mxu0 0.0
        %1588 = vmatprep.subr.mxu0 0.0
        %1589 = vmatpush1.msra.mxu0 0.0
        %1590 = vmatprep.subr.mxu0 0.0
        %1591 = vmatpush1.msra.mxu0 0.0
        %1592 = vmatprep.subr.mxu0 0.0
        %1593 = vmatpush1.msra.mxu0 0.0
        %1594 = vmatprep.subr.mxu0 0.0
        %1595 = vmatpush1.msra.mxu0 0.0
        %1596 = vmatprep.subr.mxu0 0.0
        %1597 = vmatpush1.msra.mxu0 0.0
        %1598 = vmatprep.subr.mxu0 0.0
        %1599 = vmatpush1.msra.mxu0 0.0
        %1600 = vmatprep.subr.mxu0 0.0
        %1601 = vmatpush1.msra.mxu0 0.0
        %1602 = vmatprep.subr.mxu0 0.0
        %1603 = vmatpush1.msra.mxu0 0.0
        %1604 = vmatprep.subr.mxu0 0.0
        %1605 = vmatpush1.msra.mxu0 0.0
        %1606 = vmatprep.subr.mxu0 0.0
        %1607 = vmatpush1.msra.mxu0 0.0
        %1608 = vmatprep.subr.mxu0 0.0
        %1609 = vmatpush1.msra.mxu0 0.0
        %1610 = vmatprep.subr.mxu0 0.0
        %1611 = vmatpush1.msra.mxu0 0.0
        %1612 = vmatprep.subr.mxu0 0.0
        %1613 = vmatpush1.msra.mxu0 0.0
        %1614 = vmatprep.subr.mxu0 0.0
        %1615 = vmatpush1.msra.mxu0 0.0
        %1616 = vmatprep.subr.mxu0 0.0
        %1617 = vmatpush1.msra.mxu0 0.0
        %1618 = vmatprep.subr.mxu0 0.0
        %1619 = vmatpush1.msra.mxu0 0.0
        %1620 = vmatprep.subr.mxu0 0.0
        %1621 = vmatpush1.msra.mxu0 0.0
        %1622 = vmatprep.subr.mxu0 0.0
        %1623 = vmatpush1.msra.mxu0 0.0
        %1624 = vmatprep.subr.mxu0 0.0
        %1625 = vmatpush1.msra.mxu0 0.0
        %1626 = vmatprep.mubr.f32.mxu0 0.0
        %1627 = vmatmul.mubr.f32.gmra.mrb[0].mxu0 %v1560
        %v1628 = vpop.f32.mrb[0].mxu0
        %v1629 = vadd.f32 %v1558, %v1628
        %v1630 = vpop.f32.mrb[0].mxu0
        %1631 = vdwg.mxu0
        %1633 = vrot.lane.b32.xlu0 %v1629, 32
        %v1634 = vpop.permute.xlu0 %1633
        %v1636 = vsel %vm558, %v1463, %v1634
        %v1637 = vld [vmem:[%s10] sm:$0xff]
        %v1638 = vld [vmem:[%s10 + $0x8] sm:$0xff]
        %v1639 = vld [vmem:[%s10 + $0x10] sm:$0xff]
        %v1640 = vld [vmem:[%s10 + $0x18] sm:$0xff]
        %v1641 = vld [vmem:[%s10 + $0x20] sm:$0xff]
        %v1642 = vld [vmem:[%s10 + $0x28] sm:$0xff]
        %v1643 = vld [vmem:[%s10 + $0x30] sm:$0xff]
        %v1644 = vld [vmem:[%s10 + $0x38] sm:$0xff]
        %v1645 = vld [vmem:[%s2 + $0x15] ss:$0 sm:$0xff]
        %v1647 = vsel %vm895, %v1636, 0
        %1649 = vmatprep.subr.mxu0 0.0
        %1650 = vmatpush1.msra.mxu0 %v1637
        %1651 = vmatprep.subr.mxu0 0.0
        %1652 = vmatpush1.msra.mxu0 %v1638
        %1653 = vmatprep.subr.mxu0 0.0
        %1654 = vmatpush1.msra.mxu0 %v1639
        %1655 = vmatprep.subr.mxu0 0.0
        %1656 = vmatpush1.msra.mxu0 %v1640
        %1657 = vmatprep.subr.mxu0 0.0
        %1658 = vmatpush1.msra.mxu0 %v1641
        %1659 = vmatprep.subr.mxu0 0.0
        %1660 = vmatpush1.msra.mxu0 %v1642
        %1661 = vmatprep.subr.mxu0 0.0
        %1662 = vmatpush1.msra.mxu0 %v1643
        %1663 = vmatprep.subr.mxu0 0.0
        %1664 = vmatpush1.msra.mxu0 %v1644
        %1665 = vmatprep.subr.mxu0 0.0
        %1666 = vmatpush1.msra.mxu0 0.0
        %1667 = vmatprep.subr.mxu0 0.0
        %1668 = vmatpush1.msra.mxu0 0.0
        %1669 = vmatprep.subr.mxu0 0.0
        %1670 = vmatpush1.msra.mxu0 0.0
        %1671 = vmatprep.subr.mxu0 0.0
        %1672 = vmatpush1.msra.mxu0 0.0
        %1673 = vmatprep.subr.mxu0 0.0
        %1674 = vmatpush1.msra.mxu0 0.0
        %1675 = vmatprep.subr.mxu0 0.0
        %1676 = vmatpush1.msra.mxu0 0.0
        %1677 = vmatprep.subr.mxu0 0.0
        %1678 = vmatpush1.msra.mxu0 0.0
        %1679 = vmatprep.subr.mxu0 0.0
        %1680 = vmatpush1.msra.mxu0 0.0
        %1681 = vmatprep.subr.mxu0 0.0
        %1682 = vmatpush1.msra.mxu0 0.0
        %1683 = vmatprep.subr.mxu0 0.0
        %1684 = vmatpush1.msra.mxu0 0.0
        %1685 = vmatprep.subr.mxu0 0.0
        %1686 = vmatpush1.msra.mxu0 0.0
        %1687 = vmatprep.subr.mxu0 0.0
        %1688 = vmatpush1.msra.mxu0 0.0
        %1689 = vmatprep.subr.mxu0 0.0
        %1690 = vmatpush1.msra.mxu0 0.0
        %1691 = vmatprep.subr.mxu0 0.0
        %1692 = vmatpush1.msra.mxu0 0.0
        %1693 = vmatprep.subr.mxu0 0.0
        %1694 = vmatpush1.msra.mxu0 0.0
        %1695 = vmatprep.subr.mxu0 0.0
        %1696 = vmatpush1.msra.mxu0 0.0
        %1697 = vmatprep.subr.mxu0 0.0
        %1698 = vmatpush1.msra.mxu0 0.0
        %1699 = vmatprep.subr.mxu0 0.0
        %1700 = vmatpush1.msra.mxu0 0.0
        %1701 = vmatprep.subr.mxu0 0.0
        %1702 = vmatpush1.msra.mxu0 0.0
        %1703 = vmatprep.subr.mxu0 0.0
        %1704 = vmatpush1.msra.mxu0 0.0
        %1705 = vmatprep.subr.mxu0 0.0
        %1706 = vmatpush1.msra.mxu0 0.0
        %1707 = vmatprep.subr.mxu0 0.0
        %1708 = vmatpush1.msra.mxu0 0.0
        %1709 = vmatprep.subr.mxu0 0.0
        %1710 = vmatpush1.msra.mxu0 0.0
        %1711 = vmatprep.subr.mxu0 0.0
        %1712 = vmatpush1.msra.mxu0 0.0
        %1713 = vmatprep.mubr.f32.mxu0 0.0
        %1714 = vmatmul.mubr.f32.gmra.mrb[0].mxu0 %v1647
        %v1715 = vpop.f32.mrb[0].mxu0
        %v1716 = vadd.f32 %v1645, %v1715
        %v1717 = vpop.f32.mrb[0].mxu0
        %1718 = vdwg.mxu0
        %v1719 = vld [vmem:[%s2 + $0x16] ss:$0 sm:$0xff]
        %v1720 = vmul.f32 %v1716, %v1719
        %v1721 = vld [vmem:[%s2 + $0x17] ss:$0 sm:$0xff]
        %v1722 = vadd.f32 %v1720, %v1721
        %v1723 = vmax.f32 %v1722, 0.0
        %v1724 = vld [vmem:[%s11] sm:$0xff]
        %v1725 = vld [vmem:[%s11 + $0x8] sm:$0xff]
        %v1726 = vld [vmem:[%s11 + $0x10] sm:$0xff]
        %v1727 = vld [vmem:[%s11 + $0x18] sm:$0xff]
        %v1728 = vld [vmem:[%s2 + $0x20] ss:$0 sm:$0xff]
        %v1730 = vsel %vm558, %v1723, 0
        %1732 = vmatprep.subr.mxu0 0.0
        %1733 = vmatpush1.msra.mxu0 %v1724
        %1734 = vmatprep.subr.mxu0 0.0
        %1735 = vmatpush1.msra.mxu0 %v1725
        %1736 = vmatprep.subr.mxu0 0.0
        %1737 = vmatpush1.msra.mxu0 %v1726
        %1738 = vmatprep.subr.mxu0 0.0
        %1739 = vmatpush1.msra.mxu0 %v1727
        %1740 = vmatprep.subr.mxu0 0.0
        %1741 = vmatpush1.msra.mxu0 0.0
        %1742 = vmatprep.subr.mxu0 0.0
        %1743 = vmatpush1.msra.mxu0 0.0
        %1744 = vmatprep.subr.mxu0 0.0
        %1745 = vmatpush1.msra.mxu0 0.0
        %1746 = vmatprep.subr.mxu0 0.0
        %1747 = vmatpush1.msra.mxu0 0.0
        %1748 = vmatprep.subr.mxu0 0.0
        %1749 = vmatpush1.msra.mxu0 0.0
        %1750 = vmatprep.subr.mxu0 0.0
        %1751 = vmatpush1.msra.mxu0 0.0
        %1752 = vmatprep.subr.mxu0 0.0
        %1753 = vmatpush1.msra.mxu0 0.0
        %1754 = vmatprep.subr.mxu0 0.0
        %1755 = vmatpush1.msra.mxu0 0.0
        %1756 = vmatprep.subr.mxu0 0.0
        %1757 = vmatpush1.msra.mxu0 0.0
        %1758 = vmatprep.subr.mxu0 0.0
        %1759 = vmatpush1.msra.mxu0 0.0
        %1760 = vmatprep.subr.mxu0 0.0
        %1761 = vmatpush1.msra.mxu0 0.0
        %1762 = vmatprep.subr.mxu0 0.0
        %1763 = vmatpush1.msra.mxu0 0.0
        %1764 = vmatprep.subr.mxu0 0.0
        %1765 = vmatpush1.msra.mxu0 0.0
        %1766 = vmatprep.subr.mxu0 0.0
        %1767 = vmatpush1.msra.mxu0 0.0
        %1768 = vmatprep.subr.mxu0 0.0
        %1769 = vmatpush1.msra.mxu0 0.0
        %1770 = vmatprep.subr.mxu0 0.0
        %1771 = vmatpush1.msra.mxu0 0.0
        %1772 = vmatprep.subr.mxu0 0.0
        %1773 = vmatpush1.msra.mxu0 0.0
        %1774 = vmatprep.subr.mxu0 0.0
        %1775 = vmatpush1.msra.mxu0 0.0
        %1776 = vmatprep.subr.mxu0 0.0
        %1777 = vmatpush1.msra.mxu0 0.0
        %1778 = vmatprep.subr.mxu0 0.0
        %1779 = vmatpush1.msra.mxu0 0.0
        %1780 = vmatprep.subr.mxu0 0.0
        %1781 = vmatpush1.msra.mxu0 0.0
        %1782 = vmatprep.subr.mxu0 0.0
        %1783 = vmatpush1.msra.mxu0 0.0
        %1784 = vmatprep.subr.mxu0 0.0
        %1785 = vmatpush1.msra.mxu0 0.0
        %1786 = vmatprep.subr.mxu0 0.0
        %1787 = vmatpush1.msra.mxu0 0.0
        %1788 = vmatprep.subr.mxu0 0.0
        %1789 = vmatpush1.msra.mxu0 0.0
        %1790 = vmatprep.subr.mxu0 0.0
        %1791 = vmatpush1.msra.mxu0 0.0
        %1792 = vmatprep.subr.mxu0 0.0
        %1793 = vmatpush1.msra.mxu0 0.0
        %1794 = vmatprep.subr.mxu0 0.0
        %1795 = vmatpush1.msra.mxu0 0.0
        %1796 = vmatprep.mubr.f32.mxu0 0.0
        %1797 = vmatmul.mubr.f32.gmra.mrb[0].mxu0 %v1730
        %v1798 = vpop.f32.mrb[0].mxu0
        %v1799 = vadd.f32 %v1728, %v1798
        %v1800 = vpop.f32.mrb[0].mxu0
        %1801 = vdwg.mxu0
        %vm1802 = vcmask 8192
        %1803 = vst.msk [vmem:[%s416] sm:$0x1] %vm1802, %v1799
        %s1804 = sand.u32 %s296, 1
        %s1805 = scalar_lea.sflag [#allocation3], %s1804
        %s1806 = sand.u32 %s296, 1
        %s1807 = scalar_lea.vmem [#allocation2], %s1806
        // Predicated region
        $region69: #{protein_crystallization_forward.1} parent=67 // pred_check
          %p1808 = pneg %p306
        $region70: #{protein_crystallization_forward.1} parent=67 // pred_check_branch
          %1810 = sbr.rel (%p1808) target = $region72
        $region71: #{protein_crystallization_forward.1} parent=67 // pred_region
          %s1812 = ssub.s32 16, 16
          %1813 = vsyncadd %s1805, %s1812
          %s1814 = smul.addr %s26, 16
          %s1815 = scalar_lea.hbm %s12, %s1814
          %s1817 = sshll.u32 %s1807, 4
          %s1818 = int_to_ptr.vmem [resolvable:$true] %s1817
          %1820 = dma.vmem_to_hbm [thread:$0]  %s1818, 16, %s1815, %s1805
        $region72: #{protein_crystallization_forward.1} parent=67 // pred_fallthru
          _
      $region68: #{protein_crystallization_forward.1} parent=5 // pred_fallthru
        _
      %p1821 = scmp.le.s32.totalorder 2, %s21
      // Predicated region
      $region73: #{protein_crystallization_forward.1} parent=5 // pred_check
        %p1822 = pneg %p1821
      $region74: #{protein_crystallization_forward.1} parent=5 // pred_check_branch
        %1824 = sbr.rel (%p1822) target = $region76
      $region75: #{protein_crystallization_forward.1} parent=5 // pred_region
        %s1825 = ssub.s32 %s21, 2
        // Predicated region
        $region77: #{protein_crystallization_forward.1} parent=75 // pred_check
          %p1826 = pneg %p312
        $region78: #{protein_crystallization_forward.1} parent=75 // pred_check_branch
          %1828 = sbr.rel (%p1826) target = $region80
        $region79: #{protein_crystallization_forward.1} parent=75 // pred_region
          %s1829 = sand.u32 %s297, 1
          %s1830 = scalar_lea.sflag [#allocation3], %s1829
          %s1831 = sand.u32 %s297, 1
          %s1832 = scalar_lea.vmem [#allocation2], %s1831
          %1833 = dma.done %s1830, 16
        $region80: #{protein_crystallization_forward.1} parent=75 // pred_fallthru
          _
      $region76: #{protein_crystallization_forward.1} parent=5 // pred_fallthru
        _
    $region6: #{protein_crystallization_forward.1} parent=1 // loop_footer
      %s25 = sadd.s32 1, %s21
    $region7: #{protein_crystallization_forward.1} parent=1 // loop_footer_branch
      %20 = sbr.rel target = $region3
    $region8: #{protein_crystallization_forward.1} parent=1 // loop_exit
      _
    %1834 = vsyncpa [#allocation3], 1
    %s1835 = scalar_lea.sflag [#allocation3], 1
    %1836 = vsyncpa %s1835, 1

</llo_original>
